<compile_context>
chip_gen: v5e
topology: v5e:2x2
jax: 0.10.0
libtpu: 0.0.40
codegen_flags: <defaults>
</compile_context>

<pallas_src>
import functools

import jax
import jax.numpy as jnp
from jax import lax
from jax.experimental import pallas as pl
from jax.experimental.pallas import tpu as pltpu


# ------------------------------ fused Pallas kernel ------------------------------ #

def _fused_lstm2_kernel(seq_len, blk_batch, hidden,
                        x_ref, w_ih0_ref, b0_ref, w_big_ref, b1_ref,
                        out_ref, gin_ref):
    """Fused 2-layer LSTM forward for one batch block; emits layer-1's final hidden state.

    x_ref     : (1, T*Bb, E)  time-major flattened embedded input for this batch block
    w_ih0_ref : (E, 4H)       layer-0 input->gate weights (transposed vs PyTorch)
    b0_ref    : (1, 4H)       layer-0 bias (b_ih + b_hh)
    w_big_ref : (2H, 8H)      stacked recurrent weight [[W_hh0, W_ih1], [0, W_hh1]]
    b1_ref    : (1, 4H)       layer-1 bias (b_ih + b_hh)
    out_ref   : (1, Bb, H)    output: h of layer 1 at t = T-1
    gin_ref   : (T*Bb, 4H)    scratch: hoisted layer-0 input projection
    Gate order matches PyTorch: i, f, g, o.
    """
    T, B, H = seq_len, blk_batch, hidden

    # ---- hoisted layer-0 input projection over all T timesteps (one batched MXU matmul) ----
    gin_ref[...] = (
        jnp.dot(x_ref[0], w_ih0_ref[...], preferred_element_type=jnp.float32)
        + b0_ref[...])

    w_big = w_big_ref[...]          # (2H, 8H) resident across the unrolled loop
    b1 = b1_ref[...]                # (1, 4H)

    def lstm_cell(gates, c_prev):
        # Full-width activations over the (B, 4H) tile, then static lane slices (i, f, g, o).
        sg = jax.nn.sigmoid(gates)
        th = jnp.tanh(gates)
        i = sg[:, 0 * H:1 * H]
        f = sg[:, 1 * H:2 * H]
        g = th[:, 2 * H:3 * H]
        o = sg[:, 3 * H:4 * H]
        c = f * c_prev + i * g
        h = o * jnp.tanh(c)
        return h, c

    zeros = jnp.zeros((B, H), jnp.float32)

    # ---- prologue (super-step 0): layer-0 step 0 only; h0 = c0 = 0 so gates are gin[0:B] ----
    h0, c0 = lstm_cell(gin_ref[pl.ds(0, B), :], zeros)
    h1, c1 = zeros, zeros                                    # layer-1 state at t = -1

    # ---- steady state (super-steps 1..T-1): layer-0 step s + layer-1 step s-1 ----
    # Carries live in vregs; exactly one MXU push per super-step:
    #   [h0_{s-1}, h1_{s-2}] @ W_big = [ h0@W_hh0 , h0@W_ih1 + h1@W_hh1 ]
    def step(s, carry):
        h0, c0, h1, c1 = carry
        hh = jnp.concatenate([h0, h1], axis=1)                             # (B, 2H)
        g_all = jnp.dot(hh, w_big, preferred_element_type=jnp.float32)     # (B, 8H)
        gin_s = gin_ref[pl.ds(pl.multiple_of(s * B, B), B), :]             # (B, 4H)
        h0n, c0n = lstm_cell(gin_s + g_all[:, :4 * H], c0)                 # layer 0, step s
        h1n, c1n = lstm_cell(g_all[:, 4 * H:] + b1, c1)                    # layer 1, step s-1
        return h0n, c0n, h1n, c1n

    h0, c0, h1, c1 = lax.fori_loop(1, T, step, (h0, c0, h1, c1), unroll=True)
    # TODO(synk): for long sequences switch to a bounded unroll factor (e.g. unroll=8).

    # ---- epilogue (super-step T): layer-1 step T-1 only ----
    hh = jnp.concatenate([h0, h1], axis=1)                                 # (B, 2H)
    gates1 = jnp.dot(hh, w_big[:, 4 * H:], preferred_element_type=jnp.float32) + b1
    h1, _ = lstm_cell(gates1, c1)

    out_ref[0] = h1.astype(out_ref.dtype)


def fused_sentiment_lstm(x_tbe, layers, *, num_batch_blocks=1):
    """x_tbe: (T, B, E) f32; layers: list of 2 dicts {'w_ih_t','w_hh_t','bias'} -> (B, H)."""
    assert len(layers) == 2, "fused kernel is specialised to the num_layers=2 configuration"
    T, B, E = x_tbe.shape
    H = layers[0]["w_hh_t"].shape[0]
    NB = num_batch_blocks
    assert B % NB == 0
    Bb = B // NB

    # Wrapper-side layout prep (plain XLA ops) so the kernel stays 2-D:
    #   (T, B, E) -> (NB, T*Bb, E), time-major within each batch block.
    x_blk = x_tbe.reshape(T, NB, Bb, E).transpose(1, 0, 2, 3).reshape(NB, T * Bb, E)

    w_ih0 = layers[0]["w_ih_t"]                       # (E, 4H)
    b0 = layers[0]["bias"]                            # (1, 4H)
    # Stacked recurrent weight: [h0, h1] @ W_big = [h0@W_hh0 , h0@W_ih1 + h1@W_hh1]
    w_big = jnp.zeros((2 * H, 8 * H), jnp.float32)
    w_big = w_big.at[:H, :4 * H].set(layers[0]["w_hh_t"])
    w_big = w_big.at[:H, 4 * H:].set(layers[1]["w_ih_t"])
    w_big = w_big.at[H:, 4 * H:].set(layers[1]["w_hh_t"])
    b1 = layers[1]["bias"]                            # (1, 4H)

    kernel = functools.partial(_fused_lstm2_kernel, T, Bb, H)

    out = pl.pallas_call(
        kernel,
        out_shape=jax.ShapeDtypeStruct((NB, Bb, H), jnp.float32),
        grid_spec=pltpu.PrefetchScalarGridSpec(
            num_scalar_prefetch=0,
            grid=(NB,),
            in_specs=[
                pl.BlockSpec((1, T * Bb, E), lambda nb: (nb, 0, 0)),
                pl.BlockSpec((E, 4 * H), lambda nb: (0, 0)),
                pl.BlockSpec((1, 4 * H), lambda nb: (0, 0)),
                pl.BlockSpec((2 * H, 8 * H), lambda nb: (0, 0)),
                pl.BlockSpec((1, 4 * H), lambda nb: (0, 0)),
            ],
            out_specs=pl.BlockSpec((1, Bb, H), lambda nb: (nb, 0, 0)),
            scratch_shapes=[pltpu.VMEM((T * Bb, 4 * H), jnp.float32)],
        ),
        compiler_params=pltpu.CompilerParams(
            # Batch blocks are independent -> v7x shards them across its 2 TensorCores.
            dimension_semantics=("parallel",),
        ),
    )(x_blk, w_ih0, b0, w_big, b1)

    return out.reshape(B, H)


# --------------------------------- model wrapper --------------------------------- #

def init_params(key, vocab_size, embedding_dim, hidden_size, num_layers):
    """Deterministic parameter init matching the module's shapes (gate order i, f, g, o)."""
    params = {}
    k_emb, key = jax.random.split(key)
    emb = jax.random.normal(k_emb, (vocab_size, embedding_dim), jnp.float32) * 0.1
    emb = emb.at[0].set(0.0)                         # padding_idx=0
    params["embedding"] = emb

    bound = 1.0 / jnp.sqrt(hidden_size)
    layers = []
    in_dim = embedding_dim
    for _ in range(num_layers):
        key, k1, k2, k3, k4 = jax.random.split(key, 5)
        # PyTorch stores (4H, in_dim)/(4H, H); we keep transposed (in_dim, 4H) so the kernel
        # computes x @ W directly.
        w_ih_t = jax.random.uniform(k1, (in_dim, 4 * hidden_size), jnp.float32, -bound, bound)
        w_hh_t = jax.random.uniform(k2, (hidden_size, 4 * hidden_size), jnp.float32, -bound, bound)
        b_ih = jax.random.uniform(k3, (4 * hidden_size,), jnp.float32, -bound, bound)
        b_hh = jax.random.uniform(k4, (4 * hidden_size,), jnp.float32, -bound, bound)
        layers.append({"w_ih_t": w_ih_t, "w_hh_t": w_hh_t,
                       "bias": (b_ih + b_hh).reshape(1, 4 * hidden_size)})
        in_dim = hidden_size
    params["lstm_layers"] = layers
    return params


def sentiment_lstm_forward(params, input_ids, sorted_lengths=None, *, num_batch_blocks=1):
    """Forward pass of SentimentLSTM. Returns {'pooler_output': (B, H)}.

    input_ids: (B, T) int32.  sorted_lengths is unused — the reference forward calls
    self.lstm(x) directly (no pack_padded_sequence).  Dropout is identity (eval mode).
    """
    del sorted_lengths
    # Embedding lookup (plain JAX gather glue); padding row 0 is zero.
    x = jnp.take(params["embedding"], input_ids, axis=0)      # (B, T, E)
    # self.dropout(x) -> identity at inference.
    x = jnp.transpose(x, (1, 0, 2)).astype(jnp.float32)       # (T, B, E) time-major
    pooled = fused_sentiment_lstm(x, params["lstm_layers"],
                                  num_batch_blocks=num_batch_blocks)        # (B, H)
    # self.dropout(last_hidden_state) -> identity at inference.
    return {"pooler_output": pooled}


# ----------------------------- pure-JAX reference check --------------------------- #

def _lstm_layer_ref(x_tbe, w_ih_t, w_hh_t, bias):
    T, B, _ = x_tbe.shape
    H = w_hh_t.shape[0]

    def step(carry, x_t):
        h, c = carry
        gates = x_t @ w_ih_t + h @ w_hh_t + bias
        i = jax.nn.sigmoid(gates[:, 0 * H:1 * H])
        f = jax.nn.sigmoid(gates[:, 1 * H:2 * H])
        g = jnp.tanh(gates[:, 2 * H:3 * H])
        o = jax.nn.sigmoid(gates[:, 3 * H:4 * H])
        c = f * c + i * g
        h = o * jnp.tanh(c)
        return (h, c), h

    init = (jnp.zeros((B, H), jnp.float32), jnp.zeros((B, H), jnp.float32))
    _, hs = jax.lax.scan(step, init, x_tbe)
    return hs


def _forward_ref(params, input_ids):
    x = jnp.take(params["embedding"], input_ids, axis=0)
    x = jnp.transpose(x, (1, 0, 2))
    h_seq = x
    for layer in params["lstm_layers"]:
        h_seq = _lstm_layer_ref(h_seq, layer["w_ih_t"], layer["w_hh_t"], layer["bias"])
    return h_seq[-1]


# ---------------------------------------- main ------------------------------------ #

if __name__ == "__main__":
    VOCAB = 50
    EMB_DIM = 32
    HIDDEN = 32
    NUM_LAYERS = 2
    B, T = 16, 8
    NUM_BATCH_BLOCKS = 2   # v7x: one block per TensorCore; use 1 on v5e/v6e for min latency.

    key = jax.random.PRNGKey(0)
    k_params, k_ids = jax.random.split(key)
    params = init_params(k_params, VOCAB, EMB_DIM, HIDDEN, NUM_LAYERS)

    input_ids = jax.random.randint(k_ids, (B, T), 1, VOCAB, dtype=jnp.int32)
    # make a couple of trailing positions "padding" (token id 0)
    input_ids = input_ids.at[:, -2:].set(0)
    sorted_lengths = jnp.full((B,), T - 2, dtype=jnp.int32)   # unused by forward (matches spec)

    out = sentiment_lstm_forward(params, input_ids, sorted_lengths,
                                 num_batch_blocks=NUM_BATCH_BLOCKS)
    pooled = jax.block_until_ready(out["pooler_output"])

    ref = jax.block_until_ready(_forward_ref(params, input_ids))
    assert pooled.shape == (B, HIDDEN), pooled.shape
    assert jnp.allclose(pooled, ref, atol=1e-5, rtol=1e-5), "mismatch vs JAX reference"

    print("KERNEL_OK")
</pallas_src>

<mosaic_0001>
module attributes {stable_mosaic.version = 11 : i64} {
  func.func @_fused_lstm2_kernel(%arg0: i32, %arg1: memref<1x64x32xf32, #tpu.memory_space<vmem>>, %arg2: memref<32x128xf32, #tpu.memory_space<vmem>>, %arg3: memref<1x128xf32, #tpu.memory_space<vmem>>, %arg4: memref<64x256xf32, #tpu.memory_space<vmem>>, %arg5: memref<1x128xf32, #tpu.memory_space<vmem>>, %arg6: memref<1x8x32xf32, #tpu.memory_space<vmem>>, %arg7: memref<64x128xf32, #tpu.memory_space<vmem>>) attributes {dimension_semantics = [#tpu.dimension_semantics<parallel>], iteration_bounds = array<i64: 2>, scalar_prefetch = 0 : i64, scratch_operands = 1 : i64, tpu.core_type = #tpu.core_type<tc>, window_params = [{transform_indices = @transform_0, window_bounds = array<i64: 1, 64, 32>}, {pipeline_mode = #tpu.pipeline_mode<synchronous>, transform_indices = @transform_1, window_bounds = array<i64: 32, 128>}, {pipeline_mode = #tpu.pipeline_mode<synchronous>, transform_indices = @transform_2, window_bounds = array<i64: 1, 128>}, {pipeline_mode = #tpu.pipeline_mode<synchronous>, transform_indices = @transform_3, window_bounds = array<i64: 64, 256>}, {pipeline_mode = #tpu.pipeline_mode<synchronous>, transform_indices = @transform_4, window_bounds = array<i64: 1, 128>}, {transform_indices = @transform_5, window_bounds = array<i64: 1, 8, 32>}]} {
    %c0 = arith.constant 0 : index
    %c0_0 = arith.constant 0 : index
    %c0_1 = arith.constant 0 : index
    %0 = vector.load %arg1[%c0, %c0_0, %c0_1] : memref<1x64x32xf32, #tpu.memory_space<vmem>>, vector<1x64x32xf32>
    %1 = vector.shape_cast %0 : vector<1x64x32xf32> to vector<64x32xf32>
    %c0_2 = arith.constant 0 : index
    %c0_3 = arith.constant 0 : index
    %2 = vector.load %arg2[%c0_2, %c0_3] : memref<32x128xf32, #tpu.memory_space<vmem>>, vector<32x128xf32>
    %cst = arith.constant dense<0.000000e+00> : vector<64x128xf32>
    %3 = tpu.matmul %1, %2, %cst {dimension_numbers = #tpu.dot_dimension_numbers<[1], [0], [0], [1], [0, 0, 1, 1], [], []>} : vector<64x32xf32>, vector<32x128xf32>, vector<64x128xf32> -> vector<64x128xf32>
    %c0_4 = arith.constant 0 : index
    %c0_5 = arith.constant 0 : index
    %4 = vector.load %arg3[%c0_4, %c0_5] : memref<1x128xf32, #tpu.memory_space<vmem>>, vector<1x128xf32>
    %5 = vector.broadcast %4 : vector<1x128xf32> to vector<64x128xf32>
    %6 = arith.addf %3, %5 : vector<64x128xf32>
    %c0_6 = arith.constant 0 : index
    %c0_7 = arith.constant 0 : index
    %7 = vector.load %arg7[%c0_6, %c0_7] : memref<64x128xf32, #tpu.memory_space<vmem>>, vector<64x128xf32>
    tpu.vector_store %arg7[%c0_6, %c0_7], %6 {strides = array<i32>} : memref<64x128xf32, #tpu.memory_space<vmem>>, vector<64x128xf32>,
    %c0_8 = arith.constant 0 : index
    %c0_9 = arith.constant 0 : index
    %8 = vector.load %arg4[%c0_8, %c0_9] : memref<64x256xf32, #tpu.memory_space<vmem>>, vector<64x256xf32>
    %c0_10 = arith.constant 0 : index
    %c0_11 = arith.constant 0 : index
    %9 = vector.load %arg5[%c0_10, %c0_11] : memref<1x128xf32, #tpu.memory_space<vmem>>, vector<1x128xf32>
    %cst_12 = arith.constant 0.000000e+00 : f32
    %10 = vector.broadcast %cst_12 : f32 to vector<8x32xf32>
    %c0_13 = arith.constant 0 : index
    %c0_14 = arith.constant 0 : index
    %11 = vector.load %arg7[%c0_13, %c0_14] : memref<64x128xf32, #tpu.memory_space<vmem>>, vector<8x128xf32>
    %12 = arith.negf %11 : vector<8x128xf32>
    %13 = math.exp %12 : vector<8x128xf32>
    %cst_15 = arith.constant 1.000000e+00 : f32
    %14 = vector.broadcast %cst_15 : f32 to vector<8x128xf32>
    %15 = arith.addf %14, %13 : vector<8x128xf32>
    %16 = arith.divf %14, %15 : vector<8x128xf32>
    %17 = math.tanh %11 : vector<8x128xf32>
    %18 = vector.extract_strided_slice %16 {offsets = [0, 0], sizes = [8, 32], strides = [1, 1]} : vector<8x128xf32> to vector<8x32xf32>
    %19 = vector.extract_strided_slice %16 {offsets = [0, 32], sizes = [8, 32], strides = [1, 1]} : vector<8x128xf32> to vector<8x32xf32>
    %20 = vector.extract_strided_slice %17 {offsets = [0, 64], sizes = [8, 32], strides = [1, 1]} : vector<8x128xf32> to vector<8x32xf32>
    %21 = vector.extract_strided_slice %16 {offsets = [0, 96], sizes = [8, 32], strides = [1, 1]} : vector<8x128xf32> to vector<8x32xf32>
    %22 = arith.mulf %19, %10 : vector<8x32xf32>
    %23 = arith.mulf %18, %20 : vector<8x32xf32>
    %24 = arith.addf %22, %23 : vector<8x32xf32>
    %25 = math.tanh %24 : vector<8x32xf32>
    %26 = arith.mulf %21, %25 : vector<8x32xf32>
    %c1_i32 = arith.constant 1 : i32
    %27 = tpu.concatenate %26, %10 in 1 : vector<8x32xf32>, vector<8x32xf32> -> vector<8x64xf32>
    %cst_16 = arith.constant dense<0.000000e+00> : vector<8x256xf32>
    %28 = tpu.matmul %27, %8, %cst_16 {dimension_numbers = #tpu.dot_dimension_numbers<[1], [0], [0], [1], [0, 0, 1, 1], [], []>} : vector<8x64xf32>, vector<64x256xf32>, vector<8x256xf32> -> vector<8x256xf32>
    %c8_i32 = arith.constant 8 : i32
    %29 = arith.muli %c1_i32, %c8_i32 : i32
    %30 = tpu.assume_multiple %29, 8 : i32
    %31 = arith.index_cast %30 : i32 to index
    %c0_17 = arith.constant 0 : index
    %32 = vector.load %arg7[%31, %c0_17] : memref<64x128xf32, #tpu.memory_space<vmem>>, vector<8x128xf32>
    %33 = vector.extract_strided_slice %28 {offsets = [0, 0], sizes = [8, 128], strides = [1, 1]} : vector<8x256xf32> to vector<8x128xf32>
    %34 = arith.addf %32, %33 : vector<8x128xf32>
    %35 = arith.negf %34 : vector<8x128xf32>
    %36 = math.exp %35 : vector<8x128xf32>
    %cst_18 = arith.constant 1.000000e+00 : f32
    %37 = vector.broadcast %cst_18 : f32 to vector<8x128xf32>
    %38 = arith.addf %37, %36 : vector<8x128xf32>
    %39 = arith.divf %37, %38 : vector<8x128xf32>
    %40 = math.tanh %34 : vector<8x128xf32>
    %41 = vector.extract_strided_slice %39 {offsets = [0, 0], sizes = [8, 32], strides = [1, 1]} : vector<8x128xf32> to vector<8x32xf32>
    %42 = vector.extract_strided_slice %39 {offsets = [0, 32], sizes = [8, 32], strides = [1, 1]} : vector<8x128xf32> to vector<8x32xf32>
    %43 = vector.extract_strided_slice %40 {offsets = [0, 64], sizes = [8, 32], strides = [1, 1]} : vector<8x128xf32> to vector<8x32xf32>
    %44 = vector.extract_strided_slice %39 {offsets = [0, 96], sizes = [8, 32], strides = [1, 1]} : vector<8x128xf32> to vector<8x32xf32>
    %45 = arith.mulf %42, %24 : vector<8x32xf32>
    %46 = arith.mulf %41, %43 : vector<8x32xf32>
    %47 = arith.addf %45, %46 : vector<8x32xf32>
    %48 = math.tanh %47 : vector<8x32xf32>
    %49 = arith.mulf %44, %48 : vector<8x32xf32>
    %50 = vector.extract_strided_slice %28 {offsets = [0, 128], sizes = [8, 128], strides = [1, 1]} : vector<8x256xf32> to vector<8x128xf32>
    %51 = vector.broadcast %9 : vector<1x128xf32> to vector<8x128xf32>
    %52 = arith.addf %50, %51 : vector<8x128xf32>
    %53 = arith.negf %52 : vector<8x128xf32>
    %54 = math.exp %53 : vector<8x128xf32>
    %cst_19 = arith.constant 1.000000e+00 : f32
    %55 = vector.broadcast %cst_19 : f32 to vector<8x128xf32>
    %56 = arith.addf %55, %54 : vector<8x128xf32>
    %57 = arith.divf %55, %56 : vector<8x128xf32>
    %58 = math.tanh %52 : vector<8x128xf32>
    %59 = vector.extract_strided_slice %57 {offsets = [0, 0], sizes = [8, 32], strides = [1, 1]} : vector<8x128xf32> to vector<8x32xf32>
    %60 = vector.extract_strided_slice %57 {offsets = [0, 32], sizes = [8, 32], strides = [1, 1]} : vector<8x128xf32> to vector<8x32xf32>
    %61 = vector.extract_strided_slice %58 {offsets = [0, 64], sizes = [8, 32], strides = [1, 1]} : vector<8x128xf32> to vector<8x32xf32>
    %62 = vector.extract_strided_slice %57 {offsets = [0, 96], sizes = [8, 32], strides = [1, 1]} : vector<8x128xf32> to vector<8x32xf32>
    %63 = arith.mulf %60, %10 : vector<8x32xf32>
    %64 = arith.mulf %59, %61 : vector<8x32xf32>
    %65 = arith.addf %63, %64 : vector<8x32xf32>
    %66 = math.tanh %65 : vector<8x32xf32>
    %67 = arith.mulf %62, %66 : vector<8x32xf32>
    %c2_i32 = arith.constant 2 : i32
    %68 = tpu.concatenate %49, %67 in 1 : vector<8x32xf32>, vector<8x32xf32> -> vector<8x64xf32>
    %cst_20 = arith.constant dense<0.000000e+00> : vector<8x256xf32>
    %69 = tpu.matmul %68, %8, %cst_20 {dimension_numbers = #tpu.dot_dimension_numbers<[1], [0], [0], [1], [0, 0, 1, 1], [], []>} : vector<8x64xf32>, vector<64x256xf32>, vector<8x256xf32> -> vector<8x256xf32>
    %c8_i32_21 = arith.constant 8 : i32
    %70 = arith.muli %c2_i32, %c8_i32_21 : i32
    %71 = tpu.assume_multiple %70, 8 : i32
    %72 = arith.index_cast %71 : i32 to index
    %c0_22 = arith.constant 0 : index
    %73 = vector.load %arg7[%72, %c0_22] : memref<64x128xf32, #tpu.memory_space<vmem>>, vector<8x128xf32>
    %74 = vector.extract_strided_slice %69 {offsets = [0, 0], sizes = [8, 128], strides = [1, 1]} : vector<8x256xf32> to vector<8x128xf32>
    %75 = arith.addf %73, %74 : vector<8x128xf32>
    %76 = arith.negf %75 : vector<8x128xf32>
    %77 = math.exp %76 : vector<8x128xf32>
    %cst_23 = arith.constant 1.000000e+00 : f32
    %78 = vector.broadcast %cst_23 : f32 to vector<8x128xf32>
    %79 = arith.addf %78, %77 : vector<8x128xf32>
    %80 = arith.divf %78, %79 : vector<8x128xf32>
    %81 = math.tanh %75 : vector<8x128xf32>
    %82 = vector.extract_strided_slice %80 {offsets = [0, 0], sizes = [8, 32], strides = [1, 1]} : vector<8x128xf32> to vector<8x32xf32>
    %83 = vector.extract_strided_slice %80 {offsets = [0, 32], sizes = [8, 32], strides = [1, 1]} : vector<8x128xf32> to vector<8x32xf32>
    %84 = vector.extract_strided_slice %81 {offsets = [0, 64], sizes = [8, 32], strides = [1, 1]} : vector<8x128xf32> to vector<8x32xf32>
    %85 = vector.extract_strided_slice %80 {offsets = [0, 96], sizes = [8, 32], strides = [1, 1]} : vector<8x128xf32> to vector<8x32xf32>
    %86 = arith.mulf %83, %47 : vector<8x32xf32>
    %87 = arith.mulf %82, %84 : vector<8x32xf32>
    %88 = arith.addf %86, %87 : vector<8x32xf32>
    %89 = math.tanh %88 : vector<8x32xf32>
    %90 = arith.mulf %85, %89 : vector<8x32xf32>
    %91 = vector.extract_strided_slice %69 {offsets = [0, 128], sizes = [8, 128], strides = [1, 1]} : vector<8x256xf32> to vector<8x128xf32>
    %92 = vector.broadcast %9 : vector<1x128xf32> to vector<8x128xf32>
    %93 = arith.addf %91, %92 : vector<8x128xf32>
    %94 = arith.negf %93 : vector<8x128xf32>
    %95 = math.exp %94 : vector<8x128xf32>
    %cst_24 = arith.constant 1.000000e+00 : f32
    %96 = vector.broadcast %cst_24 : f32 to vector<8x128xf32>
    %97 = arith.addf %96, %95 : vector<8x128xf32>
    %98 = arith.divf %96, %97 : vector<8x128xf32>
    %99 = math.tanh %93 : vector<8x128xf32>
    %100 = vector.extract_strided_slice %98 {offsets = [0, 0], sizes = [8, 32], strides = [1, 1]} : vector<8x128xf32> to vector<8x32xf32>
    %101 = vector.extract_strided_slice %98 {offsets = [0, 32], sizes = [8, 32], strides = [1, 1]} : vector<8x128xf32> to vector<8x32xf32>
    %102 = vector.extract_strided_slice %99 {offsets = [0, 64], sizes = [8, 32], strides = [1, 1]} : vector<8x128xf32> to vector<8x32xf32>
    %103 = vector.extract_strided_slice %98 {offsets = [0, 96], sizes = [8, 32], strides = [1, 1]} : vector<8x128xf32> to vector<8x32xf32>
    %104 = arith.mulf %101, %65 : vector<8x32xf32>
    %105 = arith.mulf %100, %102 : vector<8x32xf32>
    %106 = arith.addf %104, %105 : vector<8x32xf32>
    %107 = math.tanh %106 : vector<8x32xf32>
    %108 = arith.mulf %103, %107 : vector<8x32xf32>
    %c3_i32 = arith.constant 3 : i32
    %109 = tpu.concatenate %90, %108 in 1 : vector<8x32xf32>, vector<8x32xf32> -> vector<8x64xf32>
    %cst_25 = arith.constant dense<0.000000e+00> : vector<8x256xf32>
    %110 = tpu.matmul %109, %8, %cst_25 {dimension_numbers = #tpu.dot_dimension_numbers<[1], [0], [0], [1], [0, 0, 1, 1], [], []>} : vector<8x64xf32>, vector<64x256xf32>, vector<8x256xf32> -> vector<8x256xf32>
    %c8_i32_26 = arith.constant 8 : i32
    %111 = arith.muli %c3_i32, %c8_i32_26 : i32
    %112 = tpu.assume_multiple %111, 8 : i32
    %113 = arith.index_cast %112 : i32 to index
    %c0_27 = arith.constant 0 : index
    %114 = vector.load %arg7[%113, %c0_27] : memref<64x128xf32, #tpu.memory_space<vmem>>, vector<8x128xf32>
    %115 = vector.extract_strided_slice %110 {offsets = [0, 0], sizes = [8, 128], strides = [1, 1]} : vector<8x256xf32> to vector<8x128xf32>
    %116 = arith.addf %114, %115 : vector<8x128xf32>
    %117 = arith.negf %116 : vector<8x128xf32>
    %118 = math.exp %117 : vector<8x128xf32>
    %cst_28 = arith.constant 1.000000e+00 : f32
    %119 = vector.broadcast %cst_28 : f32 to vector<8x128xf32>
    %120 = arith.addf %119, %118 : vector<8x128xf32>
    %121 = arith.divf %119, %120 : vector<8x128xf32>
    %122 = math.tanh %116 : vector<8x128xf32>
    %123 = vector.extract_strided_slice %121 {offsets = [0, 0], sizes = [8, 32], strides = [1, 1]} : vector<8x128xf32> to vector<8x32xf32>
    %124 = vector.extract_strided_slice %121 {offsets = [0, 32], sizes = [8, 32], strides = [1, 1]} : vector<8x128xf32> to vector<8x32xf32>
    %125 = vector.extract_strided_slice %122 {offsets = [0, 64], sizes = [8, 32], strides = [1, 1]} : vector<8x128xf32> to vector<8x32xf32>
    %126 = vector.extract_strided_slice %121 {offsets = [0, 96], sizes = [8, 32], strides = [1, 1]} : vector<8x128xf32> to vector<8x32xf32>
    %127 = arith.mulf %124, %88 : vector<8x32xf32>
    %128 = arith.mulf %123, %125 : vector<8x32xf32>
    %129 = arith.addf %127, %128 : vector<8x32xf32>
    %130 = math.tanh %129 : vector<8x32xf32>
    %131 = arith.mulf %126, %130 : vector<8x32xf32>
    %132 = vector.extract_strided_slice %110 {offsets = [0, 128], sizes = [8, 128], strides = [1, 1]} : vector<8x256xf32> to vector<8x128xf32>
    %133 = vector.broadcast %9 : vector<1x128xf32> to vector<8x128xf32>
    %134 = arith.addf %132, %133 : vector<8x128xf32>
    %135 = arith.negf %134 : vector<8x128xf32>
    %136 = math.exp %135 : vector<8x128xf32>
    %cst_29 = arith.constant 1.000000e+00 : f32
    %137 = vector.broadcast %cst_29 : f32 to vector<8x128xf32>
    %138 = arith.addf %137, %136 : vector<8x128xf32>
    %139 = arith.divf %137, %138 : vector<8x128xf32>
    %140 = math.tanh %134 : vector<8x128xf32>
    %141 = vector.extract_strided_slice %139 {offsets = [0, 0], sizes = [8, 32], strides = [1, 1]} : vector<8x128xf32> to vector<8x32xf32>
    %142 = vector.extract_strided_slice %139 {offsets = [0, 32], sizes = [8, 32], strides = [1, 1]} : vector<8x128xf32> to vector<8x32xf32>
    %143 = vector.extract_strided_slice %140 {offsets = [0, 64], sizes = [8, 32], strides = [1, 1]} : vector<8x128xf32> to vector<8x32xf32>
    %144 = vector.extract_strided_slice %139 {offsets = [0, 96], sizes = [8, 32], strides = [1, 1]} : vector<8x128xf32> to vector<8x32xf32>
    %145 = arith.mulf %142, %106 : vector<8x32xf32>
    %146 = arith.mulf %141, %143 : vector<8x32xf32>
    %147 = arith.addf %145, %146 : vector<8x32xf32>
    %148 = math.tanh %147 : vector<8x32xf32>
    %149 = arith.mulf %144, %148 : vector<8x32xf32>
    %c4_i32 = arith.constant 4 : i32
    %150 = tpu.concatenate %131, %149 in 1 : vector<8x32xf32>, vector<8x32xf32> -> vector<8x64xf32>
    %cst_30 = arith.constant dense<0.000000e+00> : vector<8x256xf32>
    %151 = tpu.matmul %150, %8, %cst_30 {dimension_numbers = #tpu.dot_dimension_numbers<[1], [0], [0], [1], [0, 0, 1, 1], [], []>} : vector<8x64xf32>, vector<64x256xf32>, vector<8x256xf32> -> vector<8x256xf32>
    %c8_i32_31 = arith.constant 8 : i32
    %152 = arith.muli %c4_i32, %c8_i32_31 : i32
    %153 = tpu.assume_multiple %152, 8 : i32
    %154 = arith.index_cast %153 : i32 to index
    %c0_32 = arith.constant 0 : index
    %155 = vector.load %arg7[%154, %c0_32] : memref<64x128xf32, #tpu.memory_space<vmem>>, vector<8x128xf32>
    %156 = vector.extract_strided_slice %151 {offsets = [0, 0], sizes = [8, 128], strides = [1, 1]} : vector<8x256xf32> to vector<8x128xf32>
    %157 = arith.addf %155, %156 : vector<8x128xf32>
    %158 = arith.negf %157 : vector<8x128xf32>
    %159 = math.exp %158 : vector<8x128xf32>
    %cst_33 = arith.constant 1.000000e+00 : f32
    %160 = vector.broadcast %cst_33 : f32 to vector<8x128xf32>
    %161 = arith.addf %160, %159 : vector<8x128xf32>
    %162 = arith.divf %160, %161 : vector<8x128xf32>
    %163 = math.tanh %157 : vector<8x128xf32>
    %164 = vector.extract_strided_slice %162 {offsets = [0, 0], sizes = [8, 32], strides = [1, 1]} : vector<8x128xf32> to vector<8x32xf32>
    %165 = vector.extract_strided_slice %162 {offsets = [0, 32], sizes = [8, 32], strides = [1, 1]} : vector<8x128xf32> to vector<8x32xf32>
    %166 = vector.extract_strided_slice %163 {offsets = [0, 64], sizes = [8, 32], strides = [1, 1]} : vector<8x128xf32> to vector<8x32xf32>
    %167 = vector.extract_strided_slice %162 {offsets = [0, 96], sizes = [8, 32], strides = [1, 1]} : vector<8x128xf32> to vector<8x32xf32>
    %168 = arith.mulf %165, %129 : vector<8x32xf32>
    %169 = arith.mulf %164, %166 : vector<8x32xf32>
    %170 = arith.addf %168, %169 : vector<8x32xf32>
    %171 = math.tanh %170 : vector<8x32xf32>
    %172 = arith.mulf %167, %171 : vector<8x32xf32>
    %173 = vector.extract_strided_slice %151 {offsets = [0, 128], sizes = [8, 128], strides = [1, 1]} : vector<8x256xf32> to vector<8x128xf32>
    %174 = vector.broadcast %9 : vector<1x128xf32> to vector<8x128xf32>
    %175 = arith.addf %173, %174 : vector<8x128xf32>
    %176 = arith.negf %175 : vector<8x128xf32>
    %177 = math.exp %176 : vector<8x128xf32>
    %cst_34 = arith.constant 1.000000e+00 : f32
    %178 = vector.broadcast %cst_34 : f32 to vector<8x128xf32>
    %179 = arith.addf %178, %177 : vector<8x128xf32>
    %180 = arith.divf %178, %179 : vector<8x128xf32>
    %181 = math.tanh %175 : vector<8x128xf32>
    %182 = vector.extract_strided_slice %180 {offsets = [0, 0], sizes = [8, 32], strides = [1, 1]} : vector<8x128xf32> to vector<8x32xf32>
    %183 = vector.extract_strided_slice %180 {offsets = [0, 32], sizes = [8, 32], strides = [1, 1]} : vector<8x128xf32> to vector<8x32xf32>
    %184 = vector.extract_strided_slice %181 {offsets = [0, 64], sizes = [8, 32], strides = [1, 1]} : vector<8x128xf32> to vector<8x32xf32>
    %185 = vector.extract_strided_slice %180 {offsets = [0, 96], sizes = [8, 32], strides = [1, 1]} : vector<8x128xf32> to vector<8x32xf32>
    %186 = arith.mulf %183, %147 : vector<8x32xf32>
    %187 = arith.mulf %182, %184 : vector<8x32xf32>
    %188 = arith.addf %186, %187 : vector<8x32xf32>
    %189 = math.tanh %188 : vector<8x32xf32>
    %190 = arith.mulf %185, %189 : vector<8x32xf32>
    %c5_i32 = arith.constant 5 : i32
    %191 = tpu.concatenate %172, %190 in 1 : vector<8x32xf32>, vector<8x32xf32> -> vector<8x64xf32>
    %cst_35 = arith.constant dense<0.000000e+00> : vector<8x256xf32>
    %192 = tpu.matmul %191, %8, %cst_35 {dimension_numbers = #tpu.dot_dimension_numbers<[1], [0], [0], [1], [0, 0, 1, 1], [], []>} : vector<8x64xf32>, vector<64x256xf32>, vector<8x256xf32> -> vector<8x256xf32>
    %c8_i32_36 = arith.constant 8 : i32
    %193 = arith.muli %c5_i32, %c8_i32_36 : i32
    %194 = tpu.assume_multiple %193, 8 : i32
    %195 = arith.index_cast %194 : i32 to index
    %c0_37 = arith.constant 0 : index
    %196 = vector.load %arg7[%195, %c0_37] : memref<64x128xf32, #tpu.memory_space<vmem>>, vector<8x128xf32>
    %197 = vector.extract_strided_slice %192 {offsets = [0, 0], sizes = [8, 128], strides = [1, 1]} : vector<8x256xf32> to vector<8x128xf32>
    %198 = arith.addf %196, %197 : vector<8x128xf32>
    %199 = arith.negf %198 : vector<8x128xf32>
    %200 = math.exp %199 : vector<8x128xf32>
    %cst_38 = arith.constant 1.000000e+00 : f32
    %201 = vector.broadcast %cst_38 : f32 to vector<8x128xf32>
    %202 = arith.addf %201, %200 : vector<8x128xf32>
    %203 = arith.divf %201, %202 : vector<8x128xf32>
    %204 = math.tanh %198 : vector<8x128xf32>
    %205 = vector.extract_strided_slice %203 {offsets = [0, 0], sizes = [8, 32], strides = [1, 1]} : vector<8x128xf32> to vector<8x32xf32>
    %206 = vector.extract_strided_slice %203 {offsets = [0, 32], sizes = [8, 32], strides = [1, 1]} : vector<8x128xf32> to vector<8x32xf32>
    %207 = vector.extract_strided_slice %204 {offsets = [0, 64], sizes = [8, 32], strides = [1, 1]} : vector<8x128xf32> to vector<8x32xf32>
    %208 = vector.extract_strided_slice %203 {offsets = [0, 96], sizes = [8, 32], strides = [1, 1]} : vector<8x128xf32> to vector<8x32xf32>
    %209 = arith.mulf %206, %170 : vector<8x32xf32>
    %210 = arith.mulf %205, %207 : vector<8x32xf32>
    %211 = arith.addf %209, %210 : vector<8x32xf32>
    %212 = math.tanh %211 : vector<8x32xf32>
    %213 = arith.mulf %208, %212 : vector<8x32xf32>
    %214 = vector.extract_strided_slice %192 {offsets = [0, 128], sizes = [8, 128], strides = [1, 1]} : vector<8x256xf32> to vector<8x128xf32>
    %215 = vector.broadcast %9 : vector<1x128xf32> to vector<8x128xf32>
    %216 = arith.addf %214, %215 : vector<8x128xf32>
    %217 = arith.negf %216 : vector<8x128xf32>
    %218 = math.exp %217 : vector<8x128xf32>
    %cst_39 = arith.constant 1.000000e+00 : f32
    %219 = vector.broadcast %cst_39 : f32 to vector<8x128xf32>
    %220 = arith.addf %219, %218 : vector<8x128xf32>
    %221 = arith.divf %219, %220 : vector<8x128xf32>
    %222 = math.tanh %216 : vector<8x128xf32>
    %223 = vector.extract_strided_slice %221 {offsets = [0, 0], sizes = [8, 32], strides = [1, 1]} : vector<8x128xf32> to vector<8x32xf32>
    %224 = vector.extract_strided_slice %221 {offsets = [0, 32], sizes = [8, 32], strides = [1, 1]} : vector<8x128xf32> to vector<8x32xf32>
    %225 = vector.extract_strided_slice %222 {offsets = [0, 64], sizes = [8, 32], strides = [1, 1]} : vector<8x128xf32> to vector<8x32xf32>
    %226 = vector.extract_strided_slice %221 {offsets = [0, 96], sizes = [8, 32], strides = [1, 1]} : vector<8x128xf32> to vector<8x32xf32>
    %227 = arith.mulf %224, %188 : vector<8x32xf32>
    %228 = arith.mulf %223, %225 : vector<8x32xf32>
    %229 = arith.addf %227, %228 : vector<8x32xf32>
    %230 = math.tanh %229 : vector<8x32xf32>
    %231 = arith.mulf %226, %230 : vector<8x32xf32>
    %c6_i32 = arith.constant 6 : i32
    %232 = tpu.concatenate %213, %231 in 1 : vector<8x32xf32>, vector<8x32xf32> -> vector<8x64xf32>
    %cst_40 = arith.constant dense<0.000000e+00> : vector<8x256xf32>
    %233 = tpu.matmul %232, %8, %cst_40 {dimension_numbers = #tpu.dot_dimension_numbers<[1], [0], [0], [1], [0, 0, 1, 1], [], []>} : vector<8x64xf32>, vector<64x256xf32>, vector<8x256xf32> -> vector<8x256xf32>
    %c8_i32_41 = arith.constant 8 : i32
    %234 = arith.muli %c6_i32, %c8_i32_41 : i32
    %235 = tpu.assume_multiple %234, 8 : i32
    %236 = arith.index_cast %235 : i32 to index
    %c0_42 = arith.constant 0 : index
    %237 = vector.load %arg7[%236, %c0_42] : memref<64x128xf32, #tpu.memory_space<vmem>>, vector<8x128xf32>
    %238 = vector.extract_strided_slice %233 {offsets = [0, 0], sizes = [8, 128], strides = [1, 1]} : vector<8x256xf32> to vector<8x128xf32>
    %239 = arith.addf %237, %238 : vector<8x128xf32>
    %240 = arith.negf %239 : vector<8x128xf32>
    %241 = math.exp %240 : vector<8x128xf32>
    %cst_43 = arith.constant 1.000000e+00 : f32
    %242 = vector.broadcast %cst_43 : f32 to vector<8x128xf32>
    %243 = arith.addf %242, %241 : vector<8x128xf32>
    %244 = arith.divf %242, %243 : vector<8x128xf32>
    %245 = math.tanh %239 : vector<8x128xf32>
    %246 = vector.extract_strided_slice %244 {offsets = [0, 0], sizes = [8, 32], strides = [1, 1]} : vector<8x128xf32> to vector<8x32xf32>
    %247 = vector.extract_strided_slice %244 {offsets = [0, 32], sizes = [8, 32], strides = [1, 1]} : vector<8x128xf32> to vector<8x32xf32>
    %248 = vector.extract_strided_slice %245 {offsets = [0, 64], sizes = [8, 32], strides = [1, 1]} : vector<8x128xf32> to vector<8x32xf32>
    %249 = vector.extract_strided_slice %244 {offsets = [0, 96], sizes = [8, 32], strides = [1, 1]} : vector<8x128xf32> to vector<8x32xf32>
    %250 = arith.mulf %247, %211 : vector<8x32xf32>
    %251 = arith.mulf %246, %248 : vector<8x32xf32>
    %252 = arith.addf %250, %251 : vector<8x32xf32>
    %253 = math.tanh %252 : vector<8x32xf32>
    %254 = arith.mulf %249, %253 : vector<8x32xf32>
    %255 = vector.extract_strided_slice %233 {offsets = [0, 128], sizes = [8, 128], strides = [1, 1]} : vector<8x256xf32> to vector<8x128xf32>
    %256 = vector.broadcast %9 : vector<1x128xf32> to vector<8x128xf32>
    %257 = arith.addf %255, %256 : vector<8x128xf32>
    %258 = arith.negf %257 : vector<8x128xf32>
    %259 = math.exp %258 : vector<8x128xf32>
    %cst_44 = arith.constant 1.000000e+00 : f32
    %260 = vector.broadcast %cst_44 : f32 to vector<8x128xf32>
    %261 = arith.addf %260, %259 : vector<8x128xf32>
    %262 = arith.divf %260, %261 : vector<8x128xf32>
    %263 = math.tanh %257 : vector<8x128xf32>
    %264 = vector.extract_strided_slice %262 {offsets = [0, 0], sizes = [8, 32], strides = [1, 1]} : vector<8x128xf32> to vector<8x32xf32>
    %265 = vector.extract_strided_slice %262 {offsets = [0, 32], sizes = [8, 32], strides = [1, 1]} : vector<8x128xf32> to vector<8x32xf32>
    %266 = vector.extract_strided_slice %263 {offsets = [0, 64], sizes = [8, 32], strides = [1, 1]} : vector<8x128xf32> to vector<8x32xf32>
    %267 = vector.extract_strided_slice %262 {offsets = [0, 96], sizes = [8, 32], strides = [1, 1]} : vector<8x128xf32> to vector<8x32xf32>
    %268 = arith.mulf %265, %229 : vector<8x32xf32>
    %269 = arith.mulf %264, %266 : vector<8x32xf32>
    %270 = arith.addf %268, %269 : vector<8x32xf32>
    %271 = math.tanh %270 : vector<8x32xf32>
    %272 = arith.mulf %267, %271 : vector<8x32xf32>
    %c7_i32 = arith.constant 7 : i32
    %273 = tpu.concatenate %254, %272 in 1 : vector<8x32xf32>, vector<8x32xf32> -> vector<8x64xf32>
    %cst_45 = arith.constant dense<0.000000e+00> : vector<8x256xf32>
    %274 = tpu.matmul %273, %8, %cst_45 {dimension_numbers = #tpu.dot_dimension_numbers<[1], [0], [0], [1], [0, 0, 1, 1], [], []>} : vector<8x64xf32>, vector<64x256xf32>, vector<8x256xf32> -> vector<8x256xf32>
    %c8_i32_46 = arith.constant 8 : i32
    %275 = arith.muli %c7_i32, %c8_i32_46 : i32
    %276 = tpu.assume_multiple %275, 8 : i32
    %277 = arith.index_cast %276 : i32 to index
    %c0_47 = arith.constant 0 : index
    %278 = vector.load %arg7[%277, %c0_47] : memref<64x128xf32, #tpu.memory_space<vmem>>, vector<8x128xf32>
    %279 = vector.extract_strided_slice %274 {offsets = [0, 0], sizes = [8, 128], strides = [1, 1]} : vector<8x256xf32> to vector<8x128xf32>
    %280 = arith.addf %278, %279 : vector<8x128xf32>
    %281 = arith.negf %280 : vector<8x128xf32>
    %282 = math.exp %281 : vector<8x128xf32>
    %cst_48 = arith.constant 1.000000e+00 : f32
    %283 = vector.broadcast %cst_48 : f32 to vector<8x128xf32>
    %284 = arith.addf %283, %282 : vector<8x128xf32>
    %285 = arith.divf %283, %284 : vector<8x128xf32>
    %286 = math.tanh %280 : vector<8x128xf32>
    %287 = vector.extract_strided_slice %285 {offsets = [0, 0], sizes = [8, 32], strides = [1, 1]} : vector<8x128xf32> to vector<8x32xf32>
    %288 = vector.extract_strided_slice %285 {offsets = [0, 32], sizes = [8, 32], strides = [1, 1]} : vector<8x128xf32> to vector<8x32xf32>
    %289 = vector.extract_strided_slice %286 {offsets = [0, 64], sizes = [8, 32], strides = [1, 1]} : vector<8x128xf32> to vector<8x32xf32>
    %290 = vector.extract_strided_slice %285 {offsets = [0, 96], sizes = [8, 32], strides = [1, 1]} : vector<8x128xf32> to vector<8x32xf32>
    %291 = arith.mulf %288, %252 : vector<8x32xf32>
    %292 = arith.mulf %287, %289 : vector<8x32xf32>
    %293 = arith.addf %291, %292 : vector<8x32xf32>
    %294 = math.tanh %293 : vector<8x32xf32>
    %295 = arith.mulf %290, %294 : vector<8x32xf32>
    %296 = vector.extract_strided_slice %274 {offsets = [0, 128], sizes = [8, 128], strides = [1, 1]} : vector<8x256xf32> to vector<8x128xf32>
    %297 = vector.broadcast %9 : vector<1x128xf32> to vector<8x128xf32>
    %298 = arith.addf %296, %297 : vector<8x128xf32>
    %299 = arith.negf %298 : vector<8x128xf32>
    %300 = math.exp %299 : vector<8x128xf32>
    %cst_49 = arith.constant 1.000000e+00 : f32
    %301 = vector.broadcast %cst_49 : f32 to vector<8x128xf32>
    %302 = arith.addf %301, %300 : vector<8x128xf32>
    %303 = arith.divf %301, %302 : vector<8x128xf32>
    %304 = math.tanh %298 : vector<8x128xf32>
    %305 = vector.extract_strided_slice %303 {offsets = [0, 0], sizes = [8, 32], strides = [1, 1]} : vector<8x128xf32> to vector<8x32xf32>
    %306 = vector.extract_strided_slice %303 {offsets = [0, 32], sizes = [8, 32], strides = [1, 1]} : vector<8x128xf32> to vector<8x32xf32>
    %307 = vector.extract_strided_slice %304 {offsets = [0, 64], sizes = [8, 32], strides = [1, 1]} : vector<8x128xf32> to vector<8x32xf32>
    %308 = vector.extract_strided_slice %303 {offsets = [0, 96], sizes = [8, 32], strides = [1, 1]} : vector<8x128xf32> to vector<8x32xf32>
    %309 = arith.mulf %306, %270 : vector<8x32xf32>
    %310 = arith.mulf %305, %307 : vector<8x32xf32>
    %311 = arith.addf %309, %310 : vector<8x32xf32>
    %312 = math.tanh %311 : vector<8x32xf32>
    %313 = arith.mulf %308, %312 : vector<8x32xf32>
    %c7_i32_50 = arith.constant 7 : i32
    %314 = tpu.concatenate %295, %313 in 1 : vector<8x32xf32>, vector<8x32xf32> -> vector<8x64xf32>
    %315 = vector.extract_strided_slice %8 {offsets = [0, 128], sizes = [64, 128], strides = [1, 1]} : vector<64x256xf32> to vector<64x128xf32>
    %cst_51 = arith.constant dense<0.000000e+00> : vector<8x128xf32>
    %316 = tpu.matmul %314, %315, %cst_51 {dimension_numbers = #tpu.dot_dimension_numbers<[1], [0], [0], [1], [0, 0, 1, 1], [], []>} : vector<8x64xf32>, vector<64x128xf32>, vector<8x128xf32> -> vector<8x128xf32>
    %317 = vector.broadcast %9 : vector<1x128xf32> to vector<8x128xf32>
    %318 = arith.addf %316, %317 : vector<8x128xf32>
    %319 = arith.negf %318 : vector<8x128xf32>
    %320 = math.exp %319 : vector<8x128xf32>
    %cst_52 = arith.constant 1.000000e+00 : f32
    %321 = vector.broadcast %cst_52 : f32 to vector<8x128xf32>
    %322 = arith.addf %321, %320 : vector<8x128xf32>
    %323 = arith.divf %321, %322 : vector<8x128xf32>
    %324 = math.tanh %318 : vector<8x128xf32>
    %325 = vector.extract_strided_slice %323 {offsets = [0, 0], sizes = [8, 32], strides = [1, 1]} : vector<8x128xf32> to vector<8x32xf32>
    %326 = vector.extract_strided_slice %323 {offsets = [0, 32], sizes = [8, 32], strides = [1, 1]} : vector<8x128xf32> to vector<8x32xf32>
    %327 = vector.extract_strided_slice %324 {offsets = [0, 64], sizes = [8, 32], strides = [1, 1]} : vector<8x128xf32> to vector<8x32xf32>
    %328 = vector.extract_strided_slice %323 {offsets = [0, 96], sizes = [8, 32], strides = [1, 1]} : vector<8x128xf32> to vector<8x32xf32>
    %329 = arith.mulf %326, %311 : vector<8x32xf32>
    %330 = arith.mulf %325, %327 : vector<8x32xf32>
    %331 = arith.addf %329, %330 : vector<8x32xf32>
    %332 = math.tanh %331 : vector<8x32xf32>
    %333 = arith.mulf %328, %332 : vector<8x32xf32>
    %c0_53 = arith.constant 0 : index
    %c0_54 = arith.constant 0 : index
    %c0_55 = arith.constant 0 : index
    %334 = vector.load %arg6[%c0_53, %c0_54, %c0_55] : memref<1x8x32xf32, #tpu.memory_space<vmem>>, vector<1x8x32xf32>
    %335 = vector.shape_cast %334 : vector<1x8x32xf32> to vector<8x32xf32>
    %336 = vector.shape_cast %333 : vector<8x32xf32> to vector<1x8x32xf32>
    tpu.vector_store %arg6[%c0_53, %c0_54, %c0_55], %336 {strides = array<i32>} : memref<1x8x32xf32, #tpu.memory_space<vmem>>, vector<1x8x32xf32>,
    return
  }
  func.func @transform_0(%arg0: i32) -> (i32, i32, i32) {
    %c0_i32 = arith.constant 0 : i32
    %c0_i32_0 = arith.constant 0 : i32
    %c0_i32_1 = arith.constant 0 : i32
    return %arg0, %c0_i32, %c0_i32_0 : i32, i32, i32
  }
  func.func @transform_1(%arg0: i32) -> (i32, i32) {
    %c0_i32 = arith.constant 0 : i32
    %c0_i32_0 = arith.constant 0 : i32
    %c0_i32_1 = arith.constant 0 : i32
    return %c0_i32, %c0_i32_0 : i32, i32
  }
  func.func @transform_2(%arg0: i32) -> (i32, i32) {
    %c0_i32 = arith.constant 0 : i32
    %c0_i32_0 = arith.constant 0 : i32
    %c0_i32_1 = arith.constant 0 : i32
    return %c0_i32, %c0_i32_0 : i32, i32
  }
  func.func @transform_3(%arg0: i32) -> (i32, i32) {
    %c0_i32 = arith.constant 0 : i32
    %c0_i32_0 = arith.constant 0 : i32
    %c0_i32_1 = arith.constant 0 : i32
    return %c0_i32, %c0_i32_0 : i32, i32
  }
  func.func @transform_4(%arg0: i32) -> (i32, i32) {
    %c0_i32 = arith.constant 0 : i32
    %c0_i32_0 = arith.constant 0 : i32
    %c0_i32_1 = arith.constant 0 : i32
    return %c0_i32, %c0_i32_0 : i32, i32
  }
  func.func @transform_5(%arg0: i32) -> (i32, i32, i32) {
    %c0_i32 = arith.constant 0 : i32
    %c0_i32_0 = arith.constant 0 : i32
    %c0_i32_1 = arith.constant 0 : i32
    return %arg0, %c0_i32, %c0_i32_0 : i32, i32, i32
  }
}

</mosaic_0001>

<llo_original>
// kernel: tpu_custom_call.1
$region0: #{tpu_custom_call.1}
  #allocation0 [shape = 'u32[]', space=smem, size = 0x4, offset = 0x4, fixed_abs, tag = 'smem constant byte address 0x4 - core index']
  #allocation1 [shape = 'u32[72,128]{1,0:T(1,128)}', space=vmem, size = 0x9000, scoped, tag = 'internal scratch']
  #allocation2 [shape = 'f32[64,128]{1,0:T(8,128)}', space=vmem, size = 0x8000, scoped, tag = 'scratch operand']
  %s0 = inlined_call_operand.vmem [shape: f32[2,64,32], index: 0, kind: input, shape index: {}]
  %s1 = inlined_call_operand.vmem [shape: f32[32,128], index: 1, kind: input, shape index: {}]
  %s2 = inlined_call_operand.vmem [shape: f32[1,128], index: 2, kind: input, shape index: {}]
  %s3 = inlined_call_operand.vmem [shape: f32[64,256], index: 3, kind: input, shape index: {}]
  %s4 = inlined_call_operand.vmem [shape: f32[1,128], index: 4, kind: input, shape index: {}]
  %s5 = inlined_call_operand.hbm [shape: f32[2,8,32], index: 5, kind: output, shape index: {}]
  %s6 = sld [smem:[#allocation0]]
  $region53: #{tpu_custom_call.1} parent=0
    _
  %s8 = ssub.s32 1, %s6
  %s9 = scalar_select 0, %s8, %s6
  $region1: #{tpu_custom_call.1} parent=0
    #allocation3 [shape = 'u8[8192]{0}', space=vmem, size = 0x2000, scoped, tag = 'output window, operand 0']
    #allocation4 [shape = 's32[2]{0}', space=sflag, size = 0x8, scoped, tag = 'scoped memory for tpu_custom_call.1']
    %10 = vsyncpa [#allocation4], 0
    %s11 = scalar_lea.sflag [#allocation4], 1
    %12 = vsyncpa %s11, 0
    loop: start=0, step=1, limit=4
    $region2: #{tpu_custom_call.1} parent=1 // loop_pre_header
      _
    $region3: #{tpu_custom_call.1} parent=1 // loop_header
      %s14 = sphi 0, %s18
      %p15 = scmp.ge.s32.totalorder %s14, 4
      %s24 = sphi 0, %s26
      %s27 = sphi 0, %s24
      %s28 = sphi 0, %s27
      %s44 = sphi 0, %s28
      %s48 = sphi 0, %s48
      %s50 = sphi 0, %s48
      %s51 = sphi 0, %s50
      %s65 = sphi 0, %s51
      %s69 = sphi 0, %s69
      %s71 = sphi 0, %s69
      %s72 = sphi 0, %s71
      %s86 = sphi 0, %s72
      %s90 = sphi 0, %s90
      %s92 = sphi 0, %s90
      %s93 = sphi 0, %s92
      %s107 = sphi 0, %s93
      %s111 = sphi 0, %s111
      %s113 = sphi 0, %s111
      %s114 = sphi 0, %s113
      %s128 = sphi 0, %s114
      %s134 = sphi 0, %s136
      %s137 = sphi 0, %s134
      %s138 = sphi 0, %s137
      %s154 = sphi 0, %s138
    $region4: #{tpu_custom_call.1} parent=1 // loop_header_branch
      %17 = sbr.rel (%p15) target = $region8
    $region5: #{tpu_custom_call.1} parent=1 // loop_body
      %s19 = ssub.s32 %s14, 1
      %s20 = ssub.s32 %s14, 2
      %s21 = sadd.s32 %s14, 1
      %s22 = ssub.s32 %s14, %s21
      %p23 = scmp.eq.s32.totalorder %s22, 0
      %s25 = sadd.s32 %s24, 1
      %s26 = scalar_select %p23, %s24, %s25
      %p29 = pneg %p23
      %p30 = scmp.eq.s32.totalorder %s14, 1
      %p31 = por %p29, %p30
      %p32 = scmp.ne.s32.totalorder %s24, %s27
      %p33 = scmp.eq.s32.totalorder %s14, 0
      %p34 = por %p32, %p33
      %p35 = scmp.ne.s32.totalorder %s24, %s27
      %p36 = scmp.eq.s32.totalorder %s19, 1
      %p37 = por %p35, %p36
      %p38 = scmp.ne.s32.totalorder %s27, %s28
      %p39 = scmp.eq.s32.totalorder %s19, 0
      %p40 = por %p38, %p39
      %p41 = scmp.ne.s32.totalorder %s27, %s28
      %p42 = scmp.eq.s32.totalorder %s20, 1
      %p43 = por %p41, %p42
      %p45 = scmp.ne.s32.totalorder %s28, %s44
      %p46 = scmp.eq.s32.totalorder %s20, 0
      %p47 = por %p45, %p46
      %s49 = sadd.s32 %s48, 1
      %p52 = scmp.eq.s32.totalorder %s14, 1
      %p53 = scmp.ne.s32.totalorder %s48, %s50
      %p54 = scmp.eq.s32.totalorder %s14, 0
      %p55 = por %p53, %p54
      %p56 = scmp.ne.s32.totalorder %s48, %s50
      %p57 = scmp.eq.s32.totalorder %s19, 1
      %p58 = por %p56, %p57
      %p59 = scmp.ne.s32.totalorder %s50, %s51
      %p60 = scmp.eq.s32.totalorder %s19, 0
      %p61 = por %p59, %p60
      %p62 = scmp.ne.s32.totalorder %s50, %s51
      %p63 = scmp.eq.s32.totalorder %s20, 1
      %p64 = por %p62, %p63
      %p66 = scmp.ne.s32.totalorder %s51, %s65
      %p67 = scmp.eq.s32.totalorder %s20, 0
      %p68 = por %p66, %p67
      %s70 = sadd.s32 %s69, 1
      %p73 = scmp.eq.s32.totalorder %s14, 1
      %p74 = scmp.ne.s32.totalorder %s69, %s71
      %p75 = scmp.eq.s32.totalorder %s14, 0
      %p76 = por %p74, %p75
      %p77 = scmp.ne.s32.totalorder %s69, %s71
      %p78 = scmp.eq.s32.totalorder %s19, 1
      %p79 = por %p77, %p78
      %p80 = scmp.ne.s32.totalorder %s71, %s72
      %p81 = scmp.eq.s32.totalorder %s19, 0
      %p82 = por %p80, %p81
      %p83 = scmp.ne.s32.totalorder %s71, %s72
      %p84 = scmp.eq.s32.totalorder %s20, 1
      %p85 = por %p83, %p84
      %p87 = scmp.ne.s32.totalorder %s72, %s86
      %p88 = scmp.eq.s32.totalorder %s20, 0
      %p89 = por %p87, %p88
      %s91 = sadd.s32 %s90, 1
      %p94 = scmp.eq.s32.totalorder %s14, 1
      %p95 = scmp.ne.s32.totalorder %s90, %s92
      %p96 = scmp.eq.s32.totalorder %s14, 0
      %p97 = por %p95, %p96
      %p98 = scmp.ne.s32.totalorder %s90, %s92
      %p99 = scmp.eq.s32.totalorder %s19, 1
      %p100 = por %p98, %p99
      %p101 = scmp.ne.s32.totalorder %s92, %s93
      %p102 = scmp.eq.s32.totalorder %s19, 0
      %p103 = por %p101, %p102
      %p104 = scmp.ne.s32.totalorder %s92, %s93
      %p105 = scmp.eq.s32.totalorder %s20, 1
      %p106 = por %p104, %p105
      %p108 = scmp.ne.s32.totalorder %s93, %s107
      %p109 = scmp.eq.s32.totalorder %s20, 0
      %p110 = por %p108, %p109
      %s112 = sadd.s32 %s111, 1
      %p115 = scmp.eq.s32.totalorder %s14, 1
      %p116 = scmp.ne.s32.totalorder %s111, %s113
      %p117 = scmp.eq.s32.totalorder %s14, 0
      %p118 = por %p116, %p117
      %p119 = scmp.ne.s32.totalorder %s111, %s113
      %p120 = scmp.eq.s32.totalorder %s19, 1
      %p121 = por %p119, %p120
      %p122 = scmp.ne.s32.totalorder %s113, %s114
      %p123 = scmp.eq.s32.totalorder %s19, 0
      %p124 = por %p122, %p123
      %p125 = scmp.ne.s32.totalorder %s113, %s114
      %p126 = scmp.eq.s32.totalorder %s20, 1
      %p127 = por %p125, %p126
      %p129 = scmp.ne.s32.totalorder %s114, %s128
      %p130 = scmp.eq.s32.totalorder %s20, 0
      %p131 = por %p129, %p130
      %s132 = ssub.s32 %s14, %s21
      %p133 = scmp.eq.s32.totalorder %s132, 0
      %s135 = sadd.s32 %s134, 1
      %s136 = scalar_select %p133, %s134, %s135
      %p139 = pneg %p133
      %p140 = scmp.eq.s32.totalorder %s14, 1
      %p141 = por %p139, %p140
      %p142 = scmp.ne.s32.totalorder %s134, %s137
      %p143 = scmp.eq.s32.totalorder %s14, 0
      %p144 = por %p142, %p143
      %p145 = scmp.ne.s32.totalorder %s134, %s137
      %p146 = scmp.eq.s32.totalorder %s19, 1
      %p147 = por %p145, %p146
      %p148 = scmp.ne.s32.totalorder %s137, %s138
      %p149 = scmp.eq.s32.totalorder %s19, 0
      %p150 = por %p148, %p149
      %p151 = scmp.ne.s32.totalorder %s137, %s138
      %p152 = scmp.eq.s32.totalorder %s20, 1
      %p153 = por %p151, %p152
      %p155 = scmp.ne.s32.totalorder %s138, %s154
      %p156 = scmp.eq.s32.totalorder %s20, 0
      %p157 = por %p155, %p156
      %p158 = scmp.le.s32.totalorder 1, %s14
      %p159 = scmp.lt.s32.totalorder %s14, 3
      %p160 = pnand %p158, %p159
      %p161 = pneg %p160
      // Predicated region
      $region9: #{tpu_custom_call.1} parent=5 // pred_check
        _
      $region10: #{tpu_custom_call.1} parent=5 // pred_check_branch
        %163 = sbr.rel (%p160) target = $region12
      $region11: #{tpu_custom_call.1} parent=5 // pred_region
        %s164 = ssub.s32 %s14, 1
        // Predicated region
        $region13: #{tpu_custom_call.1} parent=11 // pred_check
          %p165 = pneg %p61
        $region14: #{tpu_custom_call.1} parent=11 // pred_check_branch
          %167 = sbr.rel (%p165) target = $region16
        $region15: #{tpu_custom_call.1} parent=11 // pred_region
          _
        $region16: #{tpu_custom_call.1} parent=11 // pred_fallthru
          _
        // Predicated region
        $region17: #{tpu_custom_call.1} parent=11 // pred_check
          %p168 = pneg %p82
        $region18: #{tpu_custom_call.1} parent=11 // pred_check_branch
          %170 = sbr.rel (%p168) target = $region20
        $region19: #{tpu_custom_call.1} parent=11 // pred_region
          _
        $region20: #{tpu_custom_call.1} parent=11 // pred_fallthru
          _
        // Predicated region
        $region21: #{tpu_custom_call.1} parent=11 // pred_check
          %p171 = pneg %p103
        $region22: #{tpu_custom_call.1} parent=11 // pred_check_branch
          %173 = sbr.rel (%p171) target = $region24
        $region23: #{tpu_custom_call.1} parent=11 // pred_region
          _
        $region24: #{tpu_custom_call.1} parent=11 // pred_fallthru
          _
        // Predicated region
        $region25: #{tpu_custom_call.1} parent=11 // pred_check
          %p174 = pneg %p124
        $region26: #{tpu_custom_call.1} parent=11 // pred_check_branch
          %176 = sbr.rel (%p174) target = $region28
        $region27: #{tpu_custom_call.1} parent=11 // pred_region
          _
        $region28: #{tpu_custom_call.1} parent=11 // pred_fallthru
          _
      $region12: #{tpu_custom_call.1} parent=5 // pred_fallthru
        _
      %p177 = scmp.lt.s32.totalorder %s14, 2
      // Predicated region
      $region29: #{tpu_custom_call.1} parent=5 // pred_check
        %p178 = pneg %p177
      $region30: #{tpu_custom_call.1} parent=5 // pred_check_branch
        %180 = sbr.rel (%p178) target = $region32
      $region31: #{tpu_custom_call.1} parent=5 // pred_region
        // Predicated region
        $region33: #{tpu_custom_call.1} parent=31 // pred_check
          %p181 = pneg %p34
        $region34: #{tpu_custom_call.1} parent=31 // pred_check_branch
          %183 = sbr.rel (%p181) target = $region36
        $region35: #{tpu_custom_call.1} parent=31 // pred_region
          %p184 = scmp.lt.s32.totalorder %s14, 1
          %s185 = scalar_select %p184, %s14, 1
          %s186 = smul.addr %s185, 8
          %s187 = smul.addr %s186, 8
          %s188 = scalar_lea.vmem %s0, %s187
        $region36: #{tpu_custom_call.1} parent=31 // pred_fallthru
          _
      $region32: #{tpu_custom_call.1} parent=5 // pred_fallthru
        _
      %p189 = scmp.le.s32.totalorder 1, %s14
      %p190 = scmp.lt.s32.totalorder %s14, 3
      %p191 = pnand %p189, %p190
      %p192 = pneg %p191
      // Predicated region
      $region37: #{tpu_custom_call.1} parent=5 // pred_check
        _
      $region38: #{tpu_custom_call.1} parent=5 // pred_check_branch
        %194 = sbr.rel (%p191) target = $region40
      $region39: #{tpu_custom_call.1} parent=5 // pred_region
        %s195 = ssub.s32 %s14, 1
        %p196 = scmp.lt.s32.totalorder %s19, 1
        %s197 = scalar_select %p196, %s19, 1
        %s198 = smul.addr %s197, 8
        %s199 = smul.addr %s198, 8
        %s200 = scalar_lea.vmem %s0, %s199
        %p201 = pneg %p40
        %p202 = pneg %p37
        %p203 = pneg %p61
        %p204 = pneg %p58
        %p205 = pneg %p82
        %p206 = pneg %p79
        %p207 = pneg %p103
        %p208 = pneg %p100
        %p209 = pneg %p124
        %p210 = pneg %p121
        %p211 = pneg %p150
        %p212 = pneg %p147
        %s213 = sand.u32 %s137, 1
        %s214 = scalar_lea.sflag [#allocation4], %s213
        %s215 = sand.u32 %s137, 1
        %s216 = smul.addr %s215, 8
        %s217 = scalar_lea.vmem [#allocation3], %s216
        %p218 = scmp.lt.s32.totalorder %s19, 1
        %s219 = scalar_select %p218, %s19, 1
        %s220 = smul.addr %s219, 8
        %s221 = smul.addr %s220, 8
        %s222 = scalar_lea.vmem %s0, %s221
        %v223 = vld [vmem:[%s222] sm:$0xff]
        %v224 = vld [vmem:[%s222 + $0x8] sm:$0xff]
        %v225 = vld [vmem:[%s222 + $0x10] sm:$0xff]
        %v226 = vld [vmem:[%s222 + $0x18] sm:$0xff]
        %v227 = vld [vmem:[%s222 + $0x20] sm:$0xff]
        %v228 = vld [vmem:[%s222 + $0x28] sm:$0xff]
        %v229 = vld [vmem:[%s222 + $0x30] sm:$0xff]
        %v230 = vld [vmem:[%s222 + $0x38] sm:$0xff]
        %v231 = vld [vmem:[%s1] sm:$0xff]
        %v232 = vld [vmem:[%s1 + $0x8] sm:$0xff]
        %v233 = vld [vmem:[%s1 + $0x10] sm:$0xff]
        %v234 = vld [vmem:[%s1 + $0x18] sm:$0xff]
        %v235 = vld [vmem:[%s2] sm:$0x1]
        %v237 = vperm.slane %v235, 0
        %vm239 = vcmask 261120
        %v241 = vsel %vm239, %v223, 0
        %v244 = vsel %vm239, %v224, 0
        %v247 = vsel %vm239, %v225, 0
        %v250 = vsel %vm239, %v226, 0
        %v253 = vsel %vm239, %v227, 0
        %v256 = vsel %vm239, %v228, 0
        %v259 = vsel %vm239, %v229, 0
        %v262 = vsel %vm239, %v230, 0
        %264 = vmatpush.msra.mxu0 0.0
        %265 = vmatpush.msra.mxu0 0.0
        %266 = vmatpush.msra.mxu0 0.0
        %267 = vmatpush.msra.mxu0 0.0
        %268 = vmatpush.msra.mxu0 0.0
        %269 = vmatpush.msra.mxu0 0.0
        %270 = vmatpush.msra.mxu0 0.0
        %271 = vmatpush.msra.mxu0 0.0
        %272 = vmatpush.msra.mxu0 0.0
        %273 = vmatpush.msra.mxu0 0.0
        %274 = vmatpush.msra.mxu0 0.0
        %275 = vmatpush.msra.mxu0 0.0
        %276 = vmatpush.msra.mxu0 %v234
        %277 = vmatpush.msra.mxu0 %v233
        %278 = vmatpush.msra.mxu0 %v232
        %279 = vmatpush.msra.mxu0 %v231
        %280 = vmatmul.f32.gmra.mxu0 %v241
        %v281 = vpop.f32.mrf.mxu0
        %v282 = vadd.f32 %v237, %v281
        %283 = vmatmul.f32.gmra.mxu0 %v244
        %v284 = vpop.f32.mrf.mxu0
        %v285 = vadd.f32 %v237, %v284
        %286 = vmatmul.f32.gmra.mxu0 %v247
        %v287 = vpop.f32.mrf.mxu0
        %v288 = vadd.f32 %v237, %v287
        %289 = vmatmul.f32.gmra.mxu0 %v250
        %v290 = vpop.f32.mrf.mxu0
        %v291 = vadd.f32 %v237, %v290
        %292 = vmatmul.f32.gmra.mxu0 %v253
        %v293 = vpop.f32.mrf.mxu0
        %v294 = vadd.f32 %v237, %v293
        %295 = vmatmul.f32.gmra.mxu0 %v256
        %v296 = vpop.f32.mrf.mxu0
        %v297 = vadd.f32 %v237, %v296
        %298 = vmatmul.f32.gmra.mxu0 %v259
        %v299 = vpop.f32.mrf.mxu0
        %v300 = vadd.f32 %v237, %v299
        %301 = vmatmul.f32.gmra.mxu0 %v262
        %v302 = vpop.f32.mrf.mxu0
        %v303 = vadd.f32 %v237, %v302
        %304 = vdwg.mxu0
        %305 = vst [vmem:[#allocation2] sm:$0xff] %v282
        %306 = vst [vmem:[#allocation2 + $0x8] sm:$0xff] %v285
        %307 = vst [vmem:[#allocation2 + $0x10] sm:$0xff] %v288
        %308 = vst [vmem:[#allocation2 + $0x18] sm:$0xff] %v291
        %309 = vst [vmem:[#allocation2 + $0x20] sm:$0xff] %v294
        %310 = vst [vmem:[#allocation2 + $0x28] sm:$0xff] %v297
        %311 = vst [vmem:[#allocation2 + $0x30] sm:$0xff] %v300
        %312 = vst [vmem:[#allocation2 + $0x38] sm:$0xff] %v303
        %v313 = vld [vmem:[%s3] sm:$0xff]
        %v314 = vld [vmem:[%s3 + $0x8] sm:$0xff]
        %v315 = vld [vmem:[%s3 + $0x10] sm:$0xff]
        %v316 = vld [vmem:[%s3 + $0x18] sm:$0xff]
        %v317 = vld [vmem:[%s3 + $0x20] sm:$0xff]
        %v318 = vld [vmem:[%s3 + $0x28] sm:$0xff]
        %v319 = vld [vmem:[%s3 + $0x30] sm:$0xff]
        %v320 = vld [vmem:[%s3 + $0x38] sm:$0xff]
        %v321 = vld [vmem:[%s3 + $0x40] sm:$0xff]
        %v322 = vld [vmem:[%s3 + $0x48] sm:$0xff]
        %v323 = vld [vmem:[%s3 + $0x50] sm:$0xff]
        %v324 = vld [vmem:[%s3 + $0x58] sm:$0xff]
        %v325 = vld [vmem:[%s3 + $0x60] sm:$0xff]
        %v326 = vld [vmem:[%s3 + $0x68] sm:$0xff]
        %v327 = vld [vmem:[%s3 + $0x70] sm:$0xff]
        %v328 = vld [vmem:[%s3 + $0x78] sm:$0xff]
        %v329 = vld [vmem:[%s4] sm:$0x1]
        %v330 = vld [vmem:[#allocation2] sm:$0xff]
        %v331 = vxor.u32 %v330, 2147483648
        %v332 = vmul.f32 %v331, 1.442695
        %v333 = vpow.pop %v332
        %v334 = vadd.f32 %v333, 1.0
        %v335 = vrcp.pop %v334
        %v336 = vmul.f32 %v334, %v335
        %v337 = vsub.f32 1.0, %v336
        %v338 = vmul.f32 %v335, %v337
        %v339 = vadd.f32 %v335, %v338
        %vm340 = vweird.f32 %v334
        %vm341 = vweird.f32 %v335
        %vm342 = vmor %vm340, %vm341
        %v343 = vsel %vm342, %v335, %v339
        %v344 = vand.u32 2147483647, %v334
        %vm345 = vcmp.eq.f32.partialorder %v344, 8.507059e+37
        %v346 = vand.u32 %v334, 2147483648
        %v347 = vor.u32 1.1754944e-38, %v346
        %v348 = vsel %vm345, %v347, %v343
        %v349 = vmul.f32 1.0, %v348
        %v350 = vtanh.pop %v330
        %v351 = vmul.f32 %v349, 0.0
        %353 = vrot.lane.b32.xlu0 %v350, 64
        %v354 = vpop.permute.xlu0 %353
        %v356 = vmul.f32 %v349, %v354
        %358 = vrot.lane.b32.xlu0 %v356, 32
        %v359 = vpop.permute.xlu0 %358
        %v361 = vadd.f32 %v351, %v359
        %v362 = vtanh.pop %v361
        %364 = vrot.lane.b32.xlu0 %v362, 64
        %v365 = vpop.permute.xlu0 %364
        %v367 = vmul.f32 %v349, %v365
        %369 = vrot.lane.b32.xlu0 %v367, 32
        %v370 = vpop.permute.xlu0 %369
        %v372 = vsel %vm239, %v370, 0.0
        %vm373 = vcmask 523264
        %v375 = vsel %vm373, %v372, 0
        %377 = vmatpush.msra.mxu0 0.0
        %378 = vmatpush.msra.mxu0 0.0
        %379 = vmatpush.msra.mxu0 0.0
        %380 = vmatpush.msra.mxu0 0.0
        %381 = vmatpush.msra.mxu0 0.0
        %382 = vmatpush.msra.mxu0 0.0
        %383 = vmatpush.msra.mxu0 0.0
        %384 = vmatpush.msra.mxu0 0.0
        %385 = vmatpush.msra.mxu0 %v327
        %386 = vmatpush.msra.mxu0 %v325
        %387 = vmatpush.msra.mxu0 %v323
        %388 = vmatpush.msra.mxu0 %v321
        %389 = vmatpush.msra.mxu0 %v319
        %390 = vmatpush.msra.mxu0 %v317
        %391 = vmatpush.msra.mxu0 %v315
        %392 = vmatpush.msra.mxu0 %v313
        %393 = vmatmul.f32.gmra.mxu0 %v375
        %v394 = vpop.f32.mrf.mxu0
        %v395 = vadd.f32 0.0, %v394
        %396 = vdwg.mxu0
        %397 = vmatpush.msra.mxu0 0.0
        %398 = vmatpush.msra.mxu0 0.0
        %399 = vmatpush.msra.mxu0 0.0
        %400 = vmatpush.msra.mxu0 0.0
        %401 = vmatpush.msra.mxu0 0.0
        %402 = vmatpush.msra.mxu0 0.0
        %403 = vmatpush.msra.mxu0 0.0
        %404 = vmatpush.msra.mxu0 0.0
        %405 = vmatpush.msra.mxu0 %v328
        %406 = vmatpush.msra.mxu0 %v326
        %407 = vmatpush.msra.mxu0 %v324
        %408 = vmatpush.msra.mxu0 %v322
        %409 = vmatpush.msra.mxu0 %v320
        %410 = vmatpush.msra.mxu0 %v318
        %411 = vmatpush.msra.mxu0 %v316
        %412 = vmatpush.msra.mxu0 %v314
        %413 = vmatmul.f32.gmra.mxu0 %v375
        %v414 = vpop.f32.mrf.mxu0
        %v415 = vadd.f32 0.0, %v414
        %416 = vdwg.mxu0
        %s417 = scalar_lea.vmem [#allocation2], 8
        %v418 = vld [vmem:[%s417] sm:$0xff]
        %v419 = vadd.f32 %v418, %v395
        %v420 = vxor.u32 %v419, 2147483648
        %v421 = vmul.f32 %v420, 1.442695
        %v422 = vpow.pop %v421
        %v423 = vadd.f32 %v422, 1.0
        %v424 = vrcp.pop %v423
        %v425 = vmul.f32 %v423, %v424
        %v426 = vsub.f32 1.0, %v425
        %v427 = vmul.f32 %v424, %v426
        %v428 = vadd.f32 %v424, %v427
        %vm429 = vweird.f32 %v423
        %vm430 = vweird.f32 %v424
        %vm431 = vmor %vm429, %vm430
        %v432 = vsel %vm431, %v424, %v428
        %v433 = vand.u32 2147483647, %v423
        %vm434 = vcmp.eq.f32.partialorder %v433, 8.507059e+37
        %v435 = vand.u32 %v423, 2147483648
        %v436 = vor.u32 1.1754944e-38, %v435
        %v437 = vsel %vm434, %v436, %v432
        %v438 = vmul.f32 1.0, %v437
        %v439 = vtanh.pop %v419
        %v440 = vmul.f32 %v438, %v361
        %442 = vrot.lane.b32.xlu0 %v439, 64
        %v443 = vpop.permute.xlu0 %442
        %v445 = vmul.f32 %v438, %v443
        %447 = vrot.lane.b32.xlu0 %v445, 32
        %v448 = vpop.permute.xlu0 %447
        %v450 = vadd.f32 %v440, %v448
        %v451 = vtanh.pop %v450
        %453 = vrot.lane.b32.xlu0 %v451, 64
        %v454 = vpop.permute.xlu0 %453
        %v456 = vmul.f32 %v438, %v454
        %v458 = vperm.slane %v329, 0
        %v460 = vadd.f32 %v415, %v458
        %v461 = vxor.u32 %v460, 2147483648
        %v462 = vmul.f32 %v461, 1.442695
        %v463 = vpow.pop %v462
        %v464 = vadd.f32 %v463, 1.0
        %v465 = vrcp.pop %v464
        %v466 = vmul.f32 %v464, %v465
        %v467 = vsub.f32 1.0, %v466
        %v468 = vmul.f32 %v465, %v467
        %v469 = vadd.f32 %v465, %v468
        %vm470 = vweird.f32 %v464
        %vm471 = vweird.f32 %v465
        %vm472 = vmor %vm470, %vm471
        %v473 = vsel %vm472, %v465, %v469
        %v474 = vand.u32 2147483647, %v464
        %vm475 = vcmp.eq.f32.partialorder %v474, 8.507059e+37
        %v476 = vand.u32 %v464, 2147483648
        %v477 = vor.u32 1.1754944e-38, %v476
        %v478 = vsel %vm475, %v477, %v473
        %v479 = vmul.f32 1.0, %v478
        %v480 = vtanh.pop %v460
        %v481 = vmul.f32 %v479, 0.0
        %483 = vrot.lane.b32.xlu0 %v480, 64
        %v484 = vpop.permute.xlu0 %483
        %v486 = vmul.f32 %v479, %v484
        %488 = vrot.lane.b32.xlu0 %v486, 32
        %v489 = vpop.permute.xlu0 %488
        %v491 = vadd.f32 %v481, %v489
        %v492 = vtanh.pop %v491
        %494 = vrot.lane.b32.xlu0 %v492, 64
        %v495 = vpop.permute.xlu0 %494
        %v497 = vmul.f32 %v479, %v495
        %499 = vrot.lane.b32.xlu0 %v456, 32
        %v500 = vpop.permute.xlu0 %499
        %503 = vrot.lane.b32.xlu0 %v497, 64
        %v504 = vpop.permute.xlu0 %503
        %v506 = vsel %vm239, %v500, %v504
        %v508 = vsel %vm373, %v506, 0
        %510 = vmatpush.msra.mxu0 0.0
        %511 = vmatpush.msra.mxu0 0.0
        %512 = vmatpush.msra.mxu0 0.0
        %513 = vmatpush.msra.mxu0 0.0
        %514 = vmatpush.msra.mxu0 0.0
        %515 = vmatpush.msra.mxu0 0.0
        %516 = vmatpush.msra.mxu0 0.0
        %517 = vmatpush.msra.mxu0 0.0
        %518 = vmatpush.msra.mxu0 %v327
        %519 = vmatpush.msra.mxu0 %v325
        %520 = vmatpush.msra.mxu0 %v323
        %521 = vmatpush.msra.mxu0 %v321
        %522 = vmatpush.msra.mxu0 %v319
        %523 = vmatpush.msra.mxu0 %v317
        %524 = vmatpush.msra.mxu0 %v315
        %525 = vmatpush.msra.mxu0 %v313
        %526 = vmatmul.f32.gmra.mxu0 %v508
        %v527 = vpop.f32.mrf.mxu0
        %v528 = vadd.f32 0.0, %v527
        %529 = vdwg.mxu0
        %530 = vmatpush.msra.mxu0 0.0
        %531 = vmatpush.msra.mxu0 0.0
        %532 = vmatpush.msra.mxu0 0.0
        %533 = vmatpush.msra.mxu0 0.0
        %534 = vmatpush.msra.mxu0 0.0
        %535 = vmatpush.msra.mxu0 0.0
        %536 = vmatpush.msra.mxu0 0.0
        %537 = vmatpush.msra.mxu0 0.0
        %538 = vmatpush.msra.mxu0 %v328
        %539 = vmatpush.msra.mxu0 %v326
        %540 = vmatpush.msra.mxu0 %v324
        %541 = vmatpush.msra.mxu0 %v322
        %542 = vmatpush.msra.mxu0 %v320
        %543 = vmatpush.msra.mxu0 %v318
        %544 = vmatpush.msra.mxu0 %v316
        %545 = vmatpush.msra.mxu0 %v314
        %546 = vmatmul.f32.gmra.mxu0 %v508
        %v547 = vpop.f32.mrf.mxu0
        %v548 = vadd.f32 0.0, %v547
        %549 = vdwg.mxu0
        %s550 = scalar_lea.vmem [#allocation2], 16
        %v551 = vld [vmem:[%s550] sm:$0xff]
        %v552 = vadd.f32 %v551, %v528
        %v553 = vxor.u32 %v552, 2147483648
        %v554 = vmul.f32 %v553, 1.442695
        %v555 = vpow.pop %v554
        %v556 = vadd.f32 %v555, 1.0
        %v557 = vrcp.pop %v556
        %v558 = vmul.f32 %v556, %v557
        %v559 = vsub.f32 1.0, %v558
        %v560 = vmul.f32 %v557, %v559
        %v561 = vadd.f32 %v557, %v560
        %vm562 = vweird.f32 %v556
        %vm563 = vweird.f32 %v557
        %vm564 = vmor %vm562, %vm563
        %v565 = vsel %vm564, %v557, %v561
        %v566 = vand.u32 2147483647, %v556
        %vm567 = vcmp.eq.f32.partialorder %v566, 8.507059e+37
        %v568 = vand.u32 %v556, 2147483648
        %v569 = vor.u32 1.1754944e-38, %v568
        %v570 = vsel %vm567, %v569, %v565
        %v571 = vmul.f32 1.0, %v570
        %v572 = vtanh.pop %v552
        %v573 = vmul.f32 %v571, %v450
        %575 = vrot.lane.b32.xlu0 %v572, 64
        %v576 = vpop.permute.xlu0 %575
        %v578 = vmul.f32 %v571, %v576
        %580 = vrot.lane.b32.xlu0 %v578, 32
        %v581 = vpop.permute.xlu0 %580
        %v583 = vadd.f32 %v573, %v581
        %v584 = vtanh.pop %v583
        %586 = vrot.lane.b32.xlu0 %v584, 64
        %v587 = vpop.permute.xlu0 %586
        %v589 = vmul.f32 %v571, %v587
        %v590 = vadd.f32 %v548, %v458
        %v591 = vxor.u32 %v590, 2147483648
        %v592 = vmul.f32 %v591, 1.442695
        %v593 = vpow.pop %v592
        %v594 = vadd.f32 %v593, 1.0
        %v595 = vrcp.pop %v594
        %v596 = vmul.f32 %v594, %v595
        %v597 = vsub.f32 1.0, %v596
        %v598 = vmul.f32 %v595, %v597
        %v599 = vadd.f32 %v595, %v598
        %vm600 = vweird.f32 %v594
        %vm601 = vweird.f32 %v595
        %vm602 = vmor %vm600, %vm601
        %v603 = vsel %vm602, %v595, %v599
        %v604 = vand.u32 2147483647, %v594
        %vm605 = vcmp.eq.f32.partialorder %v604, 8.507059e+37
        %v606 = vand.u32 %v594, 2147483648
        %v607 = vor.u32 1.1754944e-38, %v606
        %v608 = vsel %vm605, %v607, %v603
        %v609 = vmul.f32 1.0, %v608
        %v610 = vtanh.pop %v590
        %v611 = vmul.f32 %v609, %v491
        %613 = vrot.lane.b32.xlu0 %v610, 64
        %v614 = vpop.permute.xlu0 %613
        %v616 = vmul.f32 %v609, %v614
        %618 = vrot.lane.b32.xlu0 %v616, 32
        %v619 = vpop.permute.xlu0 %618
        %v621 = vadd.f32 %v611, %v619
        %v622 = vtanh.pop %v621
        %624 = vrot.lane.b32.xlu0 %v622, 64
        %v625 = vpop.permute.xlu0 %624
        %v627 = vmul.f32 %v609, %v625
        %629 = vrot.lane.b32.xlu0 %v589, 32
        %v630 = vpop.permute.xlu0 %629
        %633 = vrot.lane.b32.xlu0 %v627, 64
        %v634 = vpop.permute.xlu0 %633
        %v636 = vsel %vm239, %v630, %v634
        %v638 = vsel %vm373, %v636, 0
        %640 = vmatpush.msra.mxu0 0.0
        %641 = vmatpush.msra.mxu0 0.0
        %642 = vmatpush.msra.mxu0 0.0
        %643 = vmatpush.msra.mxu0 0.0
        %644 = vmatpush.msra.mxu0 0.0
        %645 = vmatpush.msra.mxu0 0.0
        %646 = vmatpush.msra.mxu0 0.0
        %647 = vmatpush.msra.mxu0 0.0
        %648 = vmatpush.msra.mxu0 %v327
        %649 = vmatpush.msra.mxu0 %v325
        %650 = vmatpush.msra.mxu0 %v323
        %651 = vmatpush.msra.mxu0 %v321
        %652 = vmatpush.msra.mxu0 %v319
        %653 = vmatpush.msra.mxu0 %v317
        %654 = vmatpush.msra.mxu0 %v315
        %655 = vmatpush.msra.mxu0 %v313
        %656 = vmatmul.f32.gmra.mxu0 %v638
        %v657 = vpop.f32.mrf.mxu0
        %v658 = vadd.f32 0.0, %v657
        %659 = vdwg.mxu0
        %660 = vmatpush.msra.mxu0 0.0
        %661 = vmatpush.msra.mxu0 0.0
        %662 = vmatpush.msra.mxu0 0.0
        %663 = vmatpush.msra.mxu0 0.0
        %664 = vmatpush.msra.mxu0 0.0
        %665 = vmatpush.msra.mxu0 0.0
        %666 = vmatpush.msra.mxu0 0.0
        %667 = vmatpush.msra.mxu0 0.0
        %668 = vmatpush.msra.mxu0 %v328
        %669 = vmatpush.msra.mxu0 %v326
        %670 = vmatpush.msra.mxu0 %v324
        %671 = vmatpush.msra.mxu0 %v322
        %672 = vmatpush.msra.mxu0 %v320
        %673 = vmatpush.msra.mxu0 %v318
        %674 = vmatpush.msra.mxu0 %v316
        %675 = vmatpush.msra.mxu0 %v314
        %676 = vmatmul.f32.gmra.mxu0 %v638
        %v677 = vpop.f32.mrf.mxu0
        %v678 = vadd.f32 0.0, %v677
        %679 = vdwg.mxu0
        %s680 = scalar_lea.vmem [#allocation2], 24
        %v681 = vld [vmem:[%s680] sm:$0xff]
        %v682 = vadd.f32 %v681, %v658
        %v683 = vxor.u32 %v682, 2147483648
        %v684 = vmul.f32 %v683, 1.442695
        %v685 = vpow.pop %v684
        %v686 = vadd.f32 %v685, 1.0
        %v687 = vrcp.pop %v686
        %v688 = vmul.f32 %v686, %v687
        %v689 = vsub.f32 1.0, %v688
        %v690 = vmul.f32 %v687, %v689
        %v691 = vadd.f32 %v687, %v690
        %vm692 = vweird.f32 %v686
        %vm693 = vweird.f32 %v687
        %vm694 = vmor %vm692, %vm693
        %v695 = vsel %vm694, %v687, %v691
        %v696 = vand.u32 2147483647, %v686
        %vm697 = vcmp.eq.f32.partialorder %v696, 8.507059e+37
        %v698 = vand.u32 %v686, 2147483648
        %v699 = vor.u32 1.1754944e-38, %v698
        %v700 = vsel %vm697, %v699, %v695
        %v701 = vmul.f32 1.0, %v700
        %v702 = vtanh.pop %v682
        %v703 = vmul.f32 %v701, %v583
        %705 = vrot.lane.b32.xlu0 %v702, 64
        %v706 = vpop.permute.xlu0 %705
        %v708 = vmul.f32 %v701, %v706
        %710 = vrot.lane.b32.xlu0 %v708, 32
        %v711 = vpop.permute.xlu0 %710
        %v713 = vadd.f32 %v703, %v711
        %v714 = vtanh.pop %v713
        %716 = vrot.lane.b32.xlu0 %v714, 64
        %v717 = vpop.permute.xlu0 %716
        %v719 = vmul.f32 %v701, %v717
        %v720 = vadd.f32 %v678, %v458
        %v721 = vxor.u32 %v720, 2147483648
        %v722 = vmul.f32 %v721, 1.442695
        %v723 = vpow.pop %v722
        %v724 = vadd.f32 %v723, 1.0
        %v725 = vrcp.pop %v724
        %v726 = vmul.f32 %v724, %v725
        %v727 = vsub.f32 1.0, %v726
        %v728 = vmul.f32 %v725, %v727
        %v729 = vadd.f32 %v725, %v728
        %vm730 = vweird.f32 %v724
        %vm731 = vweird.f32 %v725
        %vm732 = vmor %vm730, %vm731
        %v733 = vsel %vm732, %v725, %v729
        %v734 = vand.u32 2147483647, %v724
        %vm735 = vcmp.eq.f32.partialorder %v734, 8.507059e+37
        %v736 = vand.u32 %v724, 2147483648
        %v737 = vor.u32 1.1754944e-38, %v736
        %v738 = vsel %vm735, %v737, %v733
        %v739 = vmul.f32 1.0, %v738
        %v740 = vtanh.pop %v720
        %v741 = vmul.f32 %v739, %v621
        %743 = vrot.lane.b32.xlu0 %v740, 64
        %v744 = vpop.permute.xlu0 %743
        %v746 = vmul.f32 %v739, %v744
        %748 = vrot.lane.b32.xlu0 %v746, 32
        %v749 = vpop.permute.xlu0 %748
        %v751 = vadd.f32 %v741, %v749
        %v752 = vtanh.pop %v751
        %754 = vrot.lane.b32.xlu0 %v752, 64
        %v755 = vpop.permute.xlu0 %754
        %v757 = vmul.f32 %v739, %v755
        %759 = vrot.lane.b32.xlu0 %v719, 32
        %v760 = vpop.permute.xlu0 %759
        %763 = vrot.lane.b32.xlu0 %v757, 64
        %v764 = vpop.permute.xlu0 %763
        %v766 = vsel %vm239, %v760, %v764
        %v768 = vsel %vm373, %v766, 0
        %770 = vmatpush.msra.mxu0 0.0
        %771 = vmatpush.msra.mxu0 0.0
        %772 = vmatpush.msra.mxu0 0.0
        %773 = vmatpush.msra.mxu0 0.0
        %774 = vmatpush.msra.mxu0 0.0
        %775 = vmatpush.msra.mxu0 0.0
        %776 = vmatpush.msra.mxu0 0.0
        %777 = vmatpush.msra.mxu0 0.0
        %778 = vmatpush.msra.mxu0 %v327
        %779 = vmatpush.msra.mxu0 %v325
        %780 = vmatpush.msra.mxu0 %v323
        %781 = vmatpush.msra.mxu0 %v321
        %782 = vmatpush.msra.mxu0 %v319
        %783 = vmatpush.msra.mxu0 %v317
        %784 = vmatpush.msra.mxu0 %v315
        %785 = vmatpush.msra.mxu0 %v313
        %786 = vmatmul.f32.gmra.mxu0 %v768
        %v787 = vpop.f32.mrf.mxu0
        %v788 = vadd.f32 0.0, %v787
        %789 = vdwg.mxu0
        %790 = vmatpush.msra.mxu0 0.0
        %791 = vmatpush.msra.mxu0 0.0
        %792 = vmatpush.msra.mxu0 0.0
        %793 = vmatpush.msra.mxu0 0.0
        %794 = vmatpush.msra.mxu0 0.0
        %795 = vmatpush.msra.mxu0 0.0
        %796 = vmatpush.msra.mxu0 0.0
        %797 = vmatpush.msra.mxu0 0.0
        %798 = vmatpush.msra.mxu0 %v328
        %799 = vmatpush.msra.mxu0 %v326
        %800 = vmatpush.msra.mxu0 %v324
        %801 = vmatpush.msra.mxu0 %v322
        %802 = vmatpush.msra.mxu0 %v320
        %803 = vmatpush.msra.mxu0 %v318
        %804 = vmatpush.msra.mxu0 %v316
        %805 = vmatpush.msra.mxu0 %v314
        %806 = vmatmul.f32.gmra.mxu0 %v768
        %v807 = vpop.f32.mrf.mxu0
        %v808 = vadd.f32 0.0, %v807
        %809 = vdwg.mxu0
        %s810 = scalar_lea.vmem [#allocation2], 32
        %v811 = vld [vmem:[%s810] sm:$0xff]
        %v812 = vadd.f32 %v811, %v788
        %v813 = vxor.u32 %v812, 2147483648
        %v814 = vmul.f32 %v813, 1.442695
        %v815 = vpow.pop %v814
        %v816 = vadd.f32 %v815, 1.0
        %v817 = vrcp.pop %v816
        %v818 = vmul.f32 %v816, %v817
        %v819 = vsub.f32 1.0, %v818
        %v820 = vmul.f32 %v817, %v819
        %v821 = vadd.f32 %v817, %v820
        %vm822 = vweird.f32 %v816
        %vm823 = vweird.f32 %v817
        %vm824 = vmor %vm822, %vm823
        %v825 = vsel %vm824, %v817, %v821
        %v826 = vand.u32 2147483647, %v816
        %vm827 = vcmp.eq.f32.partialorder %v826, 8.507059e+37
        %v828 = vand.u32 %v816, 2147483648
        %v829 = vor.u32 1.1754944e-38, %v828
        %v830 = vsel %vm827, %v829, %v825
        %v831 = vmul.f32 1.0, %v830
        %v832 = vtanh.pop %v812
        %v833 = vmul.f32 %v831, %v713
        %835 = vrot.lane.b32.xlu0 %v832, 64
        %v836 = vpop.permute.xlu0 %835
        %v838 = vmul.f32 %v831, %v836
        %840 = vrot.lane.b32.xlu0 %v838, 32
        %v841 = vpop.permute.xlu0 %840
        %v843 = vadd.f32 %v833, %v841
        %v844 = vtanh.pop %v843
        %846 = vrot.lane.b32.xlu0 %v844, 64
        %v847 = vpop.permute.xlu0 %846
        %v849 = vmul.f32 %v831, %v847
        %v850 = vadd.f32 %v808, %v458
        %v851 = vxor.u32 %v850, 2147483648
        %v852 = vmul.f32 %v851, 1.442695
        %v853 = vpow.pop %v852
        %v854 = vadd.f32 %v853, 1.0
        %v855 = vrcp.pop %v854
        %v856 = vmul.f32 %v854, %v855
        %v857 = vsub.f32 1.0, %v856
        %v858 = vmul.f32 %v855, %v857
        %v859 = vadd.f32 %v855, %v858
        %vm860 = vweird.f32 %v854
        %vm861 = vweird.f32 %v855
        %vm862 = vmor %vm860, %vm861
        %v863 = vsel %vm862, %v855, %v859
        %v864 = vand.u32 2147483647, %v854
        %vm865 = vcmp.eq.f32.partialorder %v864, 8.507059e+37
        %v866 = vand.u32 %v854, 2147483648
        %v867 = vor.u32 1.1754944e-38, %v866
        %v868 = vsel %vm865, %v867, %v863
        %v869 = vmul.f32 1.0, %v868
        %v870 = vtanh.pop %v850
        %v871 = vmul.f32 %v869, %v751
        %873 = vrot.lane.b32.xlu0 %v870, 64
        %v874 = vpop.permute.xlu0 %873
        %v876 = vmul.f32 %v869, %v874
        %878 = vrot.lane.b32.xlu0 %v876, 32
        %v879 = vpop.permute.xlu0 %878
        %v881 = vadd.f32 %v871, %v879
        %v882 = vtanh.pop %v881
        %884 = vrot.lane.b32.xlu0 %v882, 64
        %v885 = vpop.permute.xlu0 %884
        %v887 = vmul.f32 %v869, %v885
        %889 = vrot.lane.b32.xlu0 %v849, 32
        %v890 = vpop.permute.xlu0 %889
        %893 = vrot.lane.b32.xlu0 %v887, 64
        %v894 = vpop.permute.xlu0 %893
        %v896 = vsel %vm239, %v890, %v894
        %v898 = vsel %vm373, %v896, 0
        %900 = vmatpush.msra.mxu0 0.0
        %901 = vmatpush.msra.mxu0 0.0
        %902 = vmatpush.msra.mxu0 0.0
        %903 = vmatpush.msra.mxu0 0.0
        %904 = vmatpush.msra.mxu0 0.0
        %905 = vmatpush.msra.mxu0 0.0
        %906 = vmatpush.msra.mxu0 0.0
        %907 = vmatpush.msra.mxu0 0.0
        %908 = vmatpush.msra.mxu0 %v327
        %909 = vmatpush.msra.mxu0 %v325
        %910 = vmatpush.msra.mxu0 %v323
        %911 = vmatpush.msra.mxu0 %v321
        %912 = vmatpush.msra.mxu0 %v319
        %913 = vmatpush.msra.mxu0 %v317
        %914 = vmatpush.msra.mxu0 %v315
        %915 = vmatpush.msra.mxu0 %v313
        %916 = vmatmul.f32.gmra.mxu0 %v898
        %v917 = vpop.f32.mrf.mxu0
        %v918 = vadd.f32 0.0, %v917
        %919 = vdwg.mxu0
        %920 = vmatpush.msra.mxu0 0.0
        %921 = vmatpush.msra.mxu0 0.0
        %922 = vmatpush.msra.mxu0 0.0
        %923 = vmatpush.msra.mxu0 0.0
        %924 = vmatpush.msra.mxu0 0.0
        %925 = vmatpush.msra.mxu0 0.0
        %926 = vmatpush.msra.mxu0 0.0
        %927 = vmatpush.msra.mxu0 0.0
        %928 = vmatpush.msra.mxu0 %v328
        %929 = vmatpush.msra.mxu0 %v326
        %930 = vmatpush.msra.mxu0 %v324
        %931 = vmatpush.msra.mxu0 %v322
        %932 = vmatpush.msra.mxu0 %v320
        %933 = vmatpush.msra.mxu0 %v318
        %934 = vmatpush.msra.mxu0 %v316
        %935 = vmatpush.msra.mxu0 %v314
        %936 = vmatmul.f32.gmra.mxu0 %v898
        %v937 = vpop.f32.mrf.mxu0
        %v938 = vadd.f32 0.0, %v937
        %939 = vdwg.mxu0
        %s940 = scalar_lea.vmem [#allocation2], 40
        %v941 = vld [vmem:[%s940] sm:$0xff]
        %v942 = vadd.f32 %v941, %v918
        %v943 = vxor.u32 %v942, 2147483648
        %v944 = vmul.f32 %v943, 1.442695
        %v945 = vpow.pop %v944
        %v946 = vadd.f32 %v945, 1.0
        %v947 = vrcp.pop %v946
        %v948 = vmul.f32 %v946, %v947
        %v949 = vsub.f32 1.0, %v948
        %v950 = vmul.f32 %v947, %v949
        %v951 = vadd.f32 %v947, %v950
        %vm952 = vweird.f32 %v946
        %vm953 = vweird.f32 %v947
        %vm954 = vmor %vm952, %vm953
        %v955 = vsel %vm954, %v947, %v951
        %v956 = vand.u32 2147483647, %v946
        %vm957 = vcmp.eq.f32.partialorder %v956, 8.507059e+37
        %v958 = vand.u32 %v946, 2147483648
        %v959 = vor.u32 1.1754944e-38, %v958
        %v960 = vsel %vm957, %v959, %v955
        %v961 = vmul.f32 1.0, %v960
        %v962 = vtanh.pop %v942
        %v963 = vmul.f32 %v961, %v843
        %965 = vrot.lane.b32.xlu0 %v962, 64
        %v966 = vpop.permute.xlu0 %965
        %v968 = vmul.f32 %v961, %v966
        %970 = vrot.lane.b32.xlu0 %v968, 32
        %v971 = vpop.permute.xlu0 %970
        %v973 = vadd.f32 %v963, %v971
        %v974 = vtanh.pop %v973
        %976 = vrot.lane.b32.xlu0 %v974, 64
        %v977 = vpop.permute.xlu0 %976
        %v979 = vmul.f32 %v961, %v977
        %v980 = vadd.f32 %v938, %v458
        %v981 = vxor.u32 %v980, 2147483648
        %v982 = vmul.f32 %v981, 1.442695
        %v983 = vpow.pop %v982
        %v984 = vadd.f32 %v983, 1.0
        %v985 = vrcp.pop %v984
        %v986 = vmul.f32 %v984, %v985
        %v987 = vsub.f32 1.0, %v986
        %v988 = vmul.f32 %v985, %v987
        %v989 = vadd.f32 %v985, %v988
        %vm990 = vweird.f32 %v984
        %vm991 = vweird.f32 %v985
        %vm992 = vmor %vm990, %vm991
        %v993 = vsel %vm992, %v985, %v989
        %v994 = vand.u32 2147483647, %v984
        %vm995 = vcmp.eq.f32.partialorder %v994, 8.507059e+37
        %v996 = vand.u32 %v984, 2147483648
        %v997 = vor.u32 1.1754944e-38, %v996
        %v998 = vsel %vm995, %v997, %v993
        %v999 = vmul.f32 1.0, %v998
        %v1000 = vtanh.pop %v980
        %v1001 = vmul.f32 %v999, %v881
        %1003 = vrot.lane.b32.xlu0 %v1000, 64
        %v1004 = vpop.permute.xlu0 %1003
        %v1006 = vmul.f32 %v999, %v1004
        %1008 = vrot.lane.b32.xlu0 %v1006, 32
        %v1009 = vpop.permute.xlu0 %1008
        %v1011 = vadd.f32 %v1001, %v1009
        %v1012 = vtanh.pop %v1011
        %1014 = vrot.lane.b32.xlu0 %v1012, 64
        %v1015 = vpop.permute.xlu0 %1014
        %v1017 = vmul.f32 %v999, %v1015
        %1019 = vrot.lane.b32.xlu0 %v979, 32
        %v1020 = vpop.permute.xlu0 %1019
        %1023 = vrot.lane.b32.xlu0 %v1017, 64
        %v1024 = vpop.permute.xlu0 %1023
        %v1026 = vsel %vm239, %v1020, %v1024
        %v1028 = vsel %vm373, %v1026, 0
        %1030 = vmatpush.msra.mxu0 0.0
        %1031 = vmatpush.msra.mxu0 0.0
        %1032 = vmatpush.msra.mxu0 0.0
        %1033 = vmatpush.msra.mxu0 0.0
        %1034 = vmatpush.msra.mxu0 0.0
        %1035 = vmatpush.msra.mxu0 0.0
        %1036 = vmatpush.msra.mxu0 0.0
        %1037 = vmatpush.msra.mxu0 0.0
        %1038 = vmatpush.msra.mxu0 %v327
        %1039 = vmatpush.msra.mxu0 %v325
        %1040 = vmatpush.msra.mxu0 %v323
        %1041 = vmatpush.msra.mxu0 %v321
        %1042 = vmatpush.msra.mxu0 %v319
        %1043 = vmatpush.msra.mxu0 %v317
        %1044 = vmatpush.msra.mxu0 %v315
        %1045 = vmatpush.msra.mxu0 %v313
        %1046 = vmatmul.f32.gmra.mxu0 %v1028
        %v1047 = vpop.f32.mrf.mxu0
        %v1048 = vadd.f32 0.0, %v1047
        %1049 = vdwg.mxu0
        %1050 = vmatpush.msra.mxu0 0.0
        %1051 = vmatpush.msra.mxu0 0.0
        %1052 = vmatpush.msra.mxu0 0.0
        %1053 = vmatpush.msra.mxu0 0.0
        %1054 = vmatpush.msra.mxu0 0.0
        %1055 = vmatpush.msra.mxu0 0.0
        %1056 = vmatpush.msra.mxu0 0.0
        %1057 = vmatpush.msra.mxu0 0.0
        %1058 = vmatpush.msra.mxu0 %v328
        %1059 = vmatpush.msra.mxu0 %v326
        %1060 = vmatpush.msra.mxu0 %v324
        %1061 = vmatpush.msra.mxu0 %v322
        %1062 = vmatpush.msra.mxu0 %v320
        %1063 = vmatpush.msra.mxu0 %v318
        %1064 = vmatpush.msra.mxu0 %v316
        %1065 = vmatpush.msra.mxu0 %v314
        %1066 = vmatmul.f32.gmra.mxu0 %v1028
        %v1067 = vpop.f32.mrf.mxu0
        %v1068 = vadd.f32 0.0, %v1067
        %1069 = vdwg.mxu0
        %s1070 = scalar_lea.vmem [#allocation2], 48
        %v1071 = vld [vmem:[%s1070] sm:$0xff]
        %v1072 = vadd.f32 %v1071, %v1048
        %v1073 = vxor.u32 %v1072, 2147483648
        %v1074 = vmul.f32 %v1073, 1.442695
        %v1075 = vpow.pop %v1074
        %v1076 = vadd.f32 %v1075, 1.0
        %v1077 = vrcp.pop %v1076
        %v1078 = vmul.f32 %v1076, %v1077
        %v1079 = vsub.f32 1.0, %v1078
        %v1080 = vmul.f32 %v1077, %v1079
        %v1081 = vadd.f32 %v1077, %v1080
        %vm1082 = vweird.f32 %v1076
        %vm1083 = vweird.f32 %v1077
        %vm1084 = vmor %vm1082, %vm1083
        %v1085 = vsel %vm1084, %v1077, %v1081
        %v1086 = vand.u32 2147483647, %v1076
        %vm1087 = vcmp.eq.f32.partialorder %v1086, 8.507059e+37
        %v1088 = vand.u32 %v1076, 2147483648
        %v1089 = vor.u32 1.1754944e-38, %v1088
        %v1090 = vsel %vm1087, %v1089, %v1085
        %v1091 = vmul.f32 1.0, %v1090
        %v1092 = vtanh.pop %v1072
        %v1093 = vmul.f32 %v1091, %v973
        %1095 = vrot.lane.b32.xlu0 %v1092, 64
        %v1096 = vpop.permute.xlu0 %1095
        %v1098 = vmul.f32 %v1091, %v1096
        %1100 = vrot.lane.b32.xlu0 %v1098, 32
        %v1101 = vpop.permute.xlu0 %1100
        %v1103 = vadd.f32 %v1093, %v1101
        %v1104 = vtanh.pop %v1103
        %1106 = vrot.lane.b32.xlu0 %v1104, 64
        %v1107 = vpop.permute.xlu0 %1106
        %v1109 = vmul.f32 %v1091, %v1107
        %v1110 = vadd.f32 %v1068, %v458
        %v1111 = vxor.u32 %v1110, 2147483648
        %v1112 = vmul.f32 %v1111, 1.442695
        %v1113 = vpow.pop %v1112
        %v1114 = vadd.f32 %v1113, 1.0
        %v1115 = vrcp.pop %v1114
        %v1116 = vmul.f32 %v1114, %v1115
        %v1117 = vsub.f32 1.0, %v1116
        %v1118 = vmul.f32 %v1115, %v1117
        %v1119 = vadd.f32 %v1115, %v1118
        %vm1120 = vweird.f32 %v1114
        %vm1121 = vweird.f32 %v1115
        %vm1122 = vmor %vm1120, %vm1121
        %v1123 = vsel %vm1122, %v1115, %v1119
        %v1124 = vand.u32 2147483647, %v1114
        %vm1125 = vcmp.eq.f32.partialorder %v1124, 8.507059e+37
        %v1126 = vand.u32 %v1114, 2147483648
        %v1127 = vor.u32 1.1754944e-38, %v1126
        %v1128 = vsel %vm1125, %v1127, %v1123
        %v1129 = vmul.f32 1.0, %v1128
        %v1130 = vtanh.pop %v1110
        %v1131 = vmul.f32 %v1129, %v1011
        %1133 = vrot.lane.b32.xlu0 %v1130, 64
        %v1134 = vpop.permute.xlu0 %1133
        %v1136 = vmul.f32 %v1129, %v1134
        %1138 = vrot.lane.b32.xlu0 %v1136, 32
        %v1139 = vpop.permute.xlu0 %1138
        %v1141 = vadd.f32 %v1131, %v1139
        %v1142 = vtanh.pop %v1141
        %1144 = vrot.lane.b32.xlu0 %v1142, 64
        %v1145 = vpop.permute.xlu0 %1144
        %v1147 = vmul.f32 %v1129, %v1145
        %1149 = vrot.lane.b32.xlu0 %v1109, 32
        %v1150 = vpop.permute.xlu0 %1149
        %1153 = vrot.lane.b32.xlu0 %v1147, 64
        %v1154 = vpop.permute.xlu0 %1153
        %v1156 = vsel %vm239, %v1150, %v1154
        %v1158 = vsel %vm373, %v1156, 0
        %1160 = vmatpush.msra.mxu0 0.0
        %1161 = vmatpush.msra.mxu0 0.0
        %1162 = vmatpush.msra.mxu0 0.0
        %1163 = vmatpush.msra.mxu0 0.0
        %1164 = vmatpush.msra.mxu0 0.0
        %1165 = vmatpush.msra.mxu0 0.0
        %1166 = vmatpush.msra.mxu0 0.0
        %1167 = vmatpush.msra.mxu0 0.0
        %1168 = vmatpush.msra.mxu0 %v327
        %1169 = vmatpush.msra.mxu0 %v325
        %1170 = vmatpush.msra.mxu0 %v323
        %1171 = vmatpush.msra.mxu0 %v321
        %1172 = vmatpush.msra.mxu0 %v319
        %1173 = vmatpush.msra.mxu0 %v317
        %1174 = vmatpush.msra.mxu0 %v315
        %1175 = vmatpush.msra.mxu0 %v313
        %1176 = vmatmul.f32.gmra.mxu0 %v1158
        %v1177 = vpop.f32.mrf.mxu0
        %v1178 = vadd.f32 0.0, %v1177
        %1179 = vdwg.mxu0
        %1180 = vmatpush.msra.mxu0 0.0
        %1181 = vmatpush.msra.mxu0 0.0
        %1182 = vmatpush.msra.mxu0 0.0
        %1183 = vmatpush.msra.mxu0 0.0
        %1184 = vmatpush.msra.mxu0 0.0
        %1185 = vmatpush.msra.mxu0 0.0
        %1186 = vmatpush.msra.mxu0 0.0
        %1187 = vmatpush.msra.mxu0 0.0
        %1188 = vmatpush.msra.mxu0 %v328
        %1189 = vmatpush.msra.mxu0 %v326
        %1190 = vmatpush.msra.mxu0 %v324
        %1191 = vmatpush.msra.mxu0 %v322
        %1192 = vmatpush.msra.mxu0 %v320
        %1193 = vmatpush.msra.mxu0 %v318
        %1194 = vmatpush.msra.mxu0 %v316
        %1195 = vmatpush.msra.mxu0 %v314
        %1196 = vmatmul.f32.gmra.mxu0 %v1158
        %v1197 = vpop.f32.mrf.mxu0
        %v1198 = vadd.f32 0.0, %v1197
        %1199 = vdwg.mxu0
        %s1200 = scalar_lea.vmem [#allocation2], 56
        %v1201 = vld [vmem:[%s1200] sm:$0xff]
        %v1202 = vadd.f32 %v1201, %v1178
        %v1203 = vxor.u32 %v1202, 2147483648
        %v1204 = vmul.f32 %v1203, 1.442695
        %v1205 = vpow.pop %v1204
        %v1206 = vadd.f32 %v1205, 1.0
        %v1207 = vrcp.pop %v1206
        %v1208 = vmul.f32 %v1206, %v1207
        %v1209 = vsub.f32 1.0, %v1208
        %v1210 = vmul.f32 %v1207, %v1209
        %v1211 = vadd.f32 %v1207, %v1210
        %vm1212 = vweird.f32 %v1206
        %vm1213 = vweird.f32 %v1207
        %vm1214 = vmor %vm1212, %vm1213
        %v1215 = vsel %vm1214, %v1207, %v1211
        %v1216 = vand.u32 2147483647, %v1206
        %vm1217 = vcmp.eq.f32.partialorder %v1216, 8.507059e+37
        %v1218 = vand.u32 %v1206, 2147483648
        %v1219 = vor.u32 1.1754944e-38, %v1218
        %v1220 = vsel %vm1217, %v1219, %v1215
        %v1221 = vmul.f32 1.0, %v1220
        %v1222 = vtanh.pop %v1202
        %v1223 = vmul.f32 %v1221, %v1103
        %1225 = vrot.lane.b32.xlu0 %v1222, 64
        %v1226 = vpop.permute.xlu0 %1225
        %v1228 = vmul.f32 %v1221, %v1226
        %1230 = vrot.lane.b32.xlu0 %v1228, 32
        %v1231 = vpop.permute.xlu0 %1230
        %v1233 = vadd.f32 %v1223, %v1231
        %v1234 = vtanh.pop %v1233
        %1236 = vrot.lane.b32.xlu0 %v1234, 64
        %v1237 = vpop.permute.xlu0 %1236
        %v1239 = vmul.f32 %v1221, %v1237
        %v1240 = vadd.f32 %v1198, %v458
        %v1241 = vxor.u32 %v1240, 2147483648
        %v1242 = vmul.f32 %v1241, 1.442695
        %v1243 = vpow.pop %v1242
        %v1244 = vadd.f32 %v1243, 1.0
        %v1245 = vrcp.pop %v1244
        %v1246 = vmul.f32 %v1244, %v1245
        %v1247 = vsub.f32 1.0, %v1246
        %v1248 = vmul.f32 %v1245, %v1247
        %v1249 = vadd.f32 %v1245, %v1248
        %vm1250 = vweird.f32 %v1244
        %vm1251 = vweird.f32 %v1245
        %vm1252 = vmor %vm1250, %vm1251
        %v1253 = vsel %vm1252, %v1245, %v1249
        %v1254 = vand.u32 2147483647, %v1244
        %vm1255 = vcmp.eq.f32.partialorder %v1254, 8.507059e+37
        %v1256 = vand.u32 %v1244, 2147483648
        %v1257 = vor.u32 1.1754944e-38, %v1256
        %v1258 = vsel %vm1255, %v1257, %v1253
        %v1259 = vmul.f32 1.0, %v1258
        %v1260 = vtanh.pop %v1240
        %v1261 = vmul.f32 %v1259, %v1141
        %1263 = vrot.lane.b32.xlu0 %v1260, 64
        %v1264 = vpop.permute.xlu0 %1263
        %v1266 = vmul.f32 %v1259, %v1264
        %1268 = vrot.lane.b32.xlu0 %v1266, 32
        %v1269 = vpop.permute.xlu0 %1268
        %v1271 = vadd.f32 %v1261, %v1269
        %v1272 = vtanh.pop %v1271
        %1274 = vrot.lane.b32.xlu0 %v1272, 64
        %v1275 = vpop.permute.xlu0 %1274
        %v1277 = vmul.f32 %v1259, %v1275
        %1279 = vrot.lane.b32.xlu0 %v1239, 32
        %v1280 = vpop.permute.xlu0 %1279
        %1283 = vrot.lane.b32.xlu0 %v1277, 64
        %v1284 = vpop.permute.xlu0 %1283
        %v1286 = vsel %vm239, %v1280, %v1284
        %v1288 = vsel %vm373, %v1286, 0
        %1290 = vmatpush.msra.mxu0 0.0
        %1291 = vmatpush.msra.mxu0 0.0
        %1292 = vmatpush.msra.mxu0 0.0
        %1293 = vmatpush.msra.mxu0 0.0
        %1294 = vmatpush.msra.mxu0 0.0
        %1295 = vmatpush.msra.mxu0 0.0
        %1296 = vmatpush.msra.mxu0 0.0
        %1297 = vmatpush.msra.mxu0 0.0
        %1298 = vmatpush.msra.mxu0 %v328
        %1299 = vmatpush.msra.mxu0 %v326
        %1300 = vmatpush.msra.mxu0 %v324
        %1301 = vmatpush.msra.mxu0 %v322
        %1302 = vmatpush.msra.mxu0 %v320
        %1303 = vmatpush.msra.mxu0 %v318
        %1304 = vmatpush.msra.mxu0 %v316
        %1305 = vmatpush.msra.mxu0 %v314
        %1306 = vmatmul.f32.gmra.mxu0 %v1288
        %v1307 = vpop.f32.mrf.mxu0
        %v1308 = vadd.f32 %v458, %v1307
        %1309 = vdwg.mxu0
        %v1310 = vxor.u32 %v1308, 2147483648
        %v1311 = vmul.f32 %v1310, 1.442695
        %v1312 = vpow.pop %v1311
        %v1313 = vadd.f32 %v1312, 1.0
        %v1314 = vrcp.pop %v1313
        %v1315 = vmul.f32 %v1313, %v1314
        %v1316 = vsub.f32 1.0, %v1315
        %v1317 = vmul.f32 %v1314, %v1316
        %v1318 = vadd.f32 %v1314, %v1317
        %vm1319 = vweird.f32 %v1313
        %vm1320 = vweird.f32 %v1314
        %vm1321 = vmor %vm1319, %vm1320
        %v1322 = vsel %vm1321, %v1314, %v1318
        %v1323 = vand.u32 2147483647, %v1313
        %vm1324 = vcmp.eq.f32.partialorder %v1323, 8.507059e+37
        %v1325 = vand.u32 %v1313, 2147483648
        %v1326 = vor.u32 1.1754944e-38, %v1325
        %v1327 = vsel %vm1324, %v1326, %v1322
        %v1328 = vmul.f32 1.0, %v1327
        %v1329 = vtanh.pop %v1308
        %v1330 = vmul.f32 %v1328, %v1271
        %1332 = vrot.lane.b32.xlu0 %v1329, 64
        %v1333 = vpop.permute.xlu0 %1332
        %v1335 = vmul.f32 %v1328, %v1333
        %1337 = vrot.lane.b32.xlu0 %v1335, 32
        %v1338 = vpop.permute.xlu0 %1337
        %v1340 = vadd.f32 %v1330, %v1338
        %v1341 = vtanh.pop %v1340
        %1343 = vrot.lane.b32.xlu0 %v1341, 64
        %v1344 = vpop.permute.xlu0 %1343
        %v1346 = vmul.f32 %v1328, %v1344
        %1348 = vrot.lane.b32.xlu0 %v1346, 32
        %v1349 = vpop.permute.xlu0 %1348
        %1351 = vst.msk [vmem:[%s217] sm:$0xff] %vm239, %v1349
        %s1352 = sand.u32 %s137, 1
        %s1353 = scalar_lea.sflag [#allocation4], %s1352
        %s1354 = sand.u32 %s137, 1
        %s1355 = smul.addr %s1354, 8
        %s1356 = scalar_lea.vmem [#allocation3], %s1355
        // Predicated region
        $region41: #{tpu_custom_call.1} parent=39 // pred_check
          %p1357 = pneg %p147
        $region42: #{tpu_custom_call.1} parent=39 // pred_check_branch
          %1359 = sbr.rel (%p1357) target = $region44
        $region43: #{tpu_custom_call.1} parent=39 // pred_region
          %1361 = vsyncadd %s1353, 0
          %s1362 = smul.addr %s19, 8
          %s1363 = scalar_lea.hbm %s5, %s1362
          %s1365 = sshll.u32 %s1356, 4
          %s1366 = int_to_ptr.vmem [resolvable:$true] %s1365
          %s1367 = sshll.u32 %s1363, 4
          %s1368 = int_to_ptr.hbm [resolvable:$true] %s1367
          %1370 = dma.vmem_to_hbm [thread:$0]  %s1366, 128, %s1368, %s1353
        $region44: #{tpu_custom_call.1} parent=39 // pred_fallthru
          _
      $region40: #{tpu_custom_call.1} parent=5 // pred_fallthru
        _
      %p1371 = scmp.le.s32.totalorder 2, %s14
      // Predicated region
      $region45: #{tpu_custom_call.1} parent=5 // pred_check
        %p1372 = pneg %p1371
      $region46: #{tpu_custom_call.1} parent=5 // pred_check_branch
        %1374 = sbr.rel (%p1372) target = $region48
      $region47: #{tpu_custom_call.1} parent=5 // pred_region
        %s1375 = ssub.s32 %s14, 2
        // Predicated region
        $region49: #{tpu_custom_call.1} parent=47 // pred_check
          %p1376 = pneg %p153
        $region50: #{tpu_custom_call.1} parent=47 // pred_check_branch
          %1378 = sbr.rel (%p1376) target = $region52
        $region51: #{tpu_custom_call.1} parent=47 // pred_region
          %s1379 = sand.u32 %s138, 1
          %s1380 = scalar_lea.sflag [#allocation4], %s1379
          %s1381 = sand.u32 %s138, 1
          %s1382 = smul.addr %s1381, 8
          %s1383 = scalar_lea.vmem [#allocation3], %s1382
          %1385 = dma.done %s1380, 128
        $region52: #{tpu_custom_call.1} parent=47 // pred_fallthru
          _
      $region48: #{tpu_custom_call.1} parent=5 // pred_fallthru
        _
    $region6: #{tpu_custom_call.1} parent=1 // loop_footer
      %s18 = sadd.s32 1, %s14
    $region7: #{tpu_custom_call.1} parent=1 // loop_footer_branch
      %13 = sbr.rel target = $region3
    $region8: #{tpu_custom_call.1} parent=1 // loop_exit
      _
    %1386 = vsyncpa [#allocation4], 1
    %s1387 = scalar_lea.sflag [#allocation4], 1
    %1388 = vsyncpa %s1387, 1

</llo_original>
